<compile_context>
chip_gen: v7x
topology: tpu7x:2x2x1
jax: 0.10.0
libtpu: 0.0.40
codegen_flags: <defaults>
</compile_context>

<pallas_src>
import functools

import jax
import jax.numpy as jnp
import numpy as np
from jax.experimental import pallas as pl
from jax.experimental.pallas import tpu as pltpu


# ----------------------------------------------------------------------------
# Small math helpers
# ----------------------------------------------------------------------------
def _sigmoid_approx(y):
    # exp + approximate reciprocal both issue on the EUP slot (frees VALU slots).
    return pl.reciprocal(1.0 + jnp.exp(-y), approx=True)


def _silu(y):
    return y * _sigmoid_approx(y)


def _pick_nb(N, C):
    """Batch elements folded per grid step so the (nb*C, HW) block is sublane-aligned."""
    for d in range(1, N + 1):
        if N % d == 0 and (d * C) % 8 == 0:
            return d
    return N  # block covers the whole batch -> block shape equals full array (always legal)


# ----------------------------------------------------------------------------
# Fused LFCA kernel: grid=(N//nb,), one (nb*C, H*W) lane-dense tile per step
# ----------------------------------------------------------------------------
def _lfca_kernel(nb, C, H, W,
                 x_ref, mk_ref, c1w1_ref, pc1_ref, c1w2_ref, hvw_ref,
                 c2w1_ref, pc2_ref, c2w2_ref, o_ref):
    HW = H * W
    c_ = C // 2

    x = x_ref[...]                     # (nb*C, HW) f32, lane-dense spatial
    mk = mk_ref[...]                   # (22, HW): rows 0..10 row-masks (a+5), 11..21 col-masks (b+5)

    def row_m(a):
        return mk[a + 5:a + 6, :]

    def col_m(b):
        return mk[11 + b + 5:11 + b + 6, :]

    # Single-axis shifts: circular lane rotation (XLU) + precomputed border mask (VPU).
    def hshift(t, b):                  # out[., h, w] = t[., h, w+b] (zero outside image)
        if b == 0:
            return t
        return pltpu.roll(t, (-b) % HW, 1) * col_m(b)

    def vshift(t, a):                  # out[., h, w] = t[., h+a, w] (zero outside image)
        if a == 0:
            return t
        return pltpu.roll(t, (-a * W) % HW, 1) * row_m(a)

    # AvgPool2d(7,1,3), count_include_pad=True == separable 1x7 then 7x1 (1/7 each).
    def avgpool7(t):
        acc = hshift(t, -3)
        for b in range(-2, 4):
            acc = acc + hshift(t, b)
        acc = acc * (1.0 / 7.0)
        out = vshift(acc, -3)
        for a in range(-2, 4):
            out = out + vshift(acc, a)
        return out * (1.0 / 7.0)

    # Row/column-factored depthwise 5x5: 4 horizontal + 4 vertical rolls total.
    def dw5(t, w):                     # w: (rows, 25) row-major taps
        hs = [hshift(t, dj - 2) for dj in range(5)]
        out = None
        for di in range(5):
            rs = w[:, di * 5:di * 5 + 1] * hs[0]
            for dj in range(1, 5):
                rs = rs + w[:, di * 5 + dj:di * 5 + dj + 1] * hs[dj]
            v = vshift(rs, di - 2)
            out = v if out is None else out + v
        return out

    def dw_h(t, w, K):                 # depthwise (1, K) 'same' conv
        p = K // 2
        acc = w[:, 0:1] * hshift(t, -p)
        for j in range(1, K):
            acc = acc + w[:, j:j + 1] * hshift(t, j - p)
        return acc

    def dw_v(t, w, K):                 # depthwise (K, 1) 'same' conv
        p = K // 2
        acc = w[:, 0:1] * vshift(t, -p)
        for i in range(1, K):
            acc = acc + w[:, i:i + 1] * vshift(t, i - p)
        return acc

    # 1x1 conv (bias-free); bf16 MXU at real channel counts, unrolled VPU FMAs otherwise.
    def pointwise(t, w):               # t: (nb*C, HW); w: (c_, C) -> (nb*c_, HW)
        outs = []
        for n in range(nb):
            tn = t[n * C:(n + 1) * C, :]
            if C >= 16 and c_ >= 16:
                y = jnp.dot(w.astype(jnp.bfloat16), tn.astype(jnp.bfloat16),
                            preferred_element_type=jnp.float32)
            else:
                y = w[:, 0:1] * tn[0:1, :]
                for i in range(1, C):
                    y = y + w[:, i:i + 1] * tn[i:i + 1, :]
            outs.append(y)
        return outs[0] if nb == 1 else jnp.concatenate(outs, axis=0)

    # GSConv. shuffled=False: output kept in unshuffled [x1; x2b] order (the shuffle was
    # folded into downstream weight permutations host-side). shuffled=True: the weights
    # were pre-permuted evens-then-odds so the shuffle is 4 contiguous block concats.
    def gsconv(t, w1, pc, w2, shuffled):
        x1 = _silu(pointwise(t, w1) * pc[:, 0:1] + pc[:, 1:2])      # (nb*c_, HW)
        x2b = _silu(dw5(x1, w2) * pc[:, 2:3] + pc[:, 3:4])          # (nb*c_, HW)
        h = c_ // 2
        parts = []
        for n in range(nb):
            a = x1[n * c_:(n + 1) * c_, :]
            b = x2b[n * c_:(n + 1) * c_, :]
            if not shuffled:
                parts += [a, b]
            elif c_ % 2 == 0:
                parts += [a[:h], b[:h], a[h:], b[h:]]
            else:
                # generic fallback (odd c_): per-row shuffle (weights not pre-permuted here)
                rows = [a[i:i + 1] for i in range(c_)] + [b[i:i + 1] for i in range(c_)]
                parts += [rows[q] for q in range(0, 2 * c_, 2)]
                parts += [rows[q] for q in range(1, 2 * c_, 2)]
        return parts[0] if len(parts) == 1 else jnp.concatenate(parts, axis=0)

    # ---- forward chain ------------------------------------------------------
    t = avgpool7(x)
    t = gsconv(t, c1w1_ref[...], pc1_ref[...], c1w2_ref[...], shuffled=False)

    hv = hvw_ref[...]                                   # (nb*C, 24) = [h_w | h_b | v_w | v_b]
    t = dw_h(t, hv[:, 0:11], 11) + hv[:, 11:12]         # h_conv (1, 11) with bias
    t = dw_v(t, hv[:, 12:23], 11) + hv[:, 23:24]        # v_conv (11, 1) with bias

    t = gsconv(t, c2w1_ref[...], pc2_ref[...], c2w2_ref[...], shuffled=True)

    # Final gate uses an EXACT sigmoid (approx error would multiply x directly).
    o_ref[...] = ((1.0 / (1.0 + jnp.exp(-t))) * x).astype(o_ref.dtype)


def lfca_forward(x, p):
    """x: (N, C, H, W) float32 -> (N, C, H, W). Single fused pallas_call over batch blocks."""
    N, C, H, W = x.shape
    HW = H * W
    c_ = C // 2
    nb = _pick_nb(N, C)
    grid_n = N // nb

    f32 = jnp.float32
    xf = x.astype(f32).reshape(N * C, HW)               # lane-dense: H*W on the last axis

    # --- host-side (free) permutations that absorb the GSConv channel shuffles ---
    # GSConv shuffle: true channel j  <-  cat channel sigma(j); sigma^-1 = interleave.
    inv_perm = np.empty(C, np.int64)
    inv_perm[0::2] = np.arange(c_)
    inv_perm[1::2] = np.arange(c_, C)
    if c_ % 2 == 0:
        pi = np.concatenate([np.arange(0, c_, 2), np.arange(1, c_, 2)])   # evens then odds
    else:
        pi = np.arange(c_)

    def tile_rows(a, r):
        return jnp.tile(a.astype(f32), (r, 1))

    q1, q2 = p["conv1"], p["conv2"]

    # conv1 (output kept unshuffled in-kernel -> its own weights are unpermuted)
    c1w1 = q1["w1"].astype(f32)                                                   # (c_, C)
    pc1 = tile_rows(jnp.stack([q1["s1"], q1["b1"], q1["s2"], q1["b2"]], axis=1), nb)  # (nb*c_,4)
    c1w2 = tile_rows(q1["w2"].reshape(c_, 25), nb)                                # (nb*c_, 25)

    # h_conv / v_conv: per-channel weights permuted into conv1's unshuffled order
    hw = p["h_w"].reshape(C, 11)[inv_perm]
    hb = p["h_b"][inv_perm][:, None]
    vw = p["v_w"].reshape(C, 11)[inv_perm]
    vb = p["v_b"][inv_perm][:, None]
    hvw = tile_rows(jnp.concatenate([hw, hb, vw, vb], axis=1), nb)                # (nb*C, 24)

    # conv2: input columns absorb conv1's shuffle; rows pre-permuted (evens-then-odds)
    # so conv2's own shuffle reduces to 4 contiguous block concats in-kernel.
    c2w1 = q2["w1"][pi][:, inv_perm].astype(f32)                                  # (c_, C)
    pc2 = tile_rows(jnp.stack([q2["s1"][pi], q2["b1"][pi],
                               q2["s2"][pi], q2["b2"][pi]], axis=1), nb)          # (nb*c_, 4)
    c2w2 = tile_rows(q2["w2"].reshape(c_, 25)[pi], nb)                            # (nb*c_, 25)

    # Border masks for all shift offsets (|a|,|b| <= 5), built ONCE host-side.
    idx = np.arange(HW)
    h_idx, w_idx = idx // W, idx % W
    rmask = np.stack([((h_idx + a >= 0) & (h_idx + a < H)) for a in range(-5, 6)])
    cmask = np.stack([((w_idx + b >= 0) & (w_idx + b < W)) for b in range(-5, 6)])
    masks = jnp.asarray(np.concatenate([rmask, cmask], axis=0).astype(np.float32))  # (22, HW)

    operands = [xf, masks, c1w1, pc1, c1w2, hvw, c2w1, pc2, c2w2]
    # Weights/masks: full-array blocks, constant index_map (fetched once, stay VMEM-resident).
    in_specs = [pl.BlockSpec((nb * C, HW), lambda n: (n, 0))]
    in_specs += [pl.BlockSpec(op.shape, lambda n: (0, 0)) for op in operands[1:]]

    out = pl.pallas_call(
        functools.partial(_lfca_kernel, nb, C, H, W),
        out_shape=jax.ShapeDtypeStruct((N * C, HW), jnp.float32),
        grid=(grid_n,),
        in_specs=in_specs,
        out_specs=pl.BlockSpec((nb * C, HW), lambda n: (n, 0)),
        compiler_params=pltpu.CompilerParams(
            dimension_semantics=("parallel",),           # shards batch blocks across v7x's 2 TCs
            vmem_limit_bytes=32 * 1024 * 1024,
        ),
    )(*operands)
    return out.reshape(N, C, H, W)


# ----------------------------------------------------------------------------
# Pure-JAX reference (host-side) for correctness checking
# ----------------------------------------------------------------------------
def _ref_dw(x, w, ph, pw):
    N, C, H, W = x.shape
    kh, kw = int(w.shape[1]), int(w.shape[2])
    xp = jnp.pad(x, ((0, 0), (0, 0), (ph, ph), (pw, pw)))
    acc = jnp.zeros((N, C, H, W), jnp.float32)
    for di in range(kh):
        for dj in range(kw):
            acc = acc + w[None, :, di:di + 1, dj:dj + 1] * xp[:, :, di:di + H, dj:dj + W]
    return acc


def _ref_gsconv(x, q):
    N, _, H, W = x.shape
    c_ = int(q["w1"].shape[0])
    x1 = jnp.einsum("oc,nchw->nohw", q["w1"], x, precision="highest")
    x1 = x1 * q["s1"][None, :, None, None] + q["b1"][None, :, None, None]
    x1 = x1 * jax.nn.sigmoid(x1)
    x2b = _ref_dw(x1, q["w2"], 2, 2)
    x2b = x2b * q["s2"][None, :, None, None] + q["b2"][None, :, None, None]
    x2b = x2b * jax.nn.sigmoid(x2b)
    x2 = jnp.concatenate([x1, x2b], axis=1)
    x2r = x2.reshape(N, c_, 2, H, W)
    return jnp.concatenate([x2r[:, :, 0], x2r[:, :, 1]], axis=1)


def lfca_reference(x, p):
    N, C, H, W = x.shape
    avg_w = jnp.full((C, 7, 7), 1.0 / 49.0, jnp.float32)
    t = _ref_dw(x, avg_w, 3, 3)
    t = _ref_gsconv(t, p["conv1"])
    t = _ref_dw(t, p["h_w"], 0, 5) + p["h_b"][None, :, None, None]
    t = _ref_dw(t, p["v_w"], 5, 0) + p["v_b"][None, :, None, None]
    t = _ref_gsconv(t, p["conv2"])
    return jax.nn.sigmoid(t) * x


# ----------------------------------------------------------------------------
# Deterministic synthetic parameters (BatchNorm folded to eval-mode scale/bias)
# ----------------------------------------------------------------------------
# TODO(synk): BatchNorm running-statistics update (training mode) is not modeled; eval fold only.
def _fold_bn(keys, c):
    kg, kb, km, kv = keys
    gamma = 1.0 + 0.1 * jax.random.normal(kg, (c,), jnp.float32)
    beta = 0.1 * jax.random.normal(kb, (c,), jnp.float32)
    mean = 0.1 * jax.random.normal(km, (c,), jnp.float32)
    var = 1.0 + 0.1 * jax.random.uniform(kv, (c,), jnp.float32)
    scale = gamma / jnp.sqrt(var + 1e-5)
    bias = beta - mean * scale
    return scale, bias


def init_gsconv(key, c1, c2):
    c_ = c2 // 2
    ks = jax.random.split(key, 10)
    w1 = 0.3 * jax.random.normal(ks[0], (c_, c1), jnp.float32)      # 1x1 conv weight
    s1, b1 = _fold_bn(ks[1:5], c_)
    w2 = 0.3 * jax.random.normal(ks[5], (c_, 5, 5), jnp.float32)    # depthwise 5x5
    s2, b2 = _fold_bn(ks[6:10], c_)
    return dict(w1=w1, s1=s1, b1=b1, w2=w2, s2=s2, b2=b2)


def init_lfca(key, ch):
    ks = jax.random.split(key, 6)
    return dict(
        conv1=init_gsconv(ks[0], ch, ch),
        conv2=init_gsconv(ks[1], ch, ch),
        h_w=0.2 * jax.random.normal(ks[2], (ch, 1, 11), jnp.float32),
        h_b=0.1 * jax.random.normal(ks[3], (ch,), jnp.float32),
        v_w=0.2 * jax.random.normal(ks[4], (ch, 11, 1), jnp.float32),
        v_b=0.1 * jax.random.normal(ks[5], (ch,), jnp.float32),
    )


if __name__ == "__main__":
    key = jax.random.PRNGKey(0)
    kx, kp = jax.random.split(key)
    N, C, H, W = 2, 4, 16, 16
    x = jax.random.normal(kx, (N, C, H, W), jnp.float32)
    params = init_lfca(kp, C)

    out = jax.block_until_ready(jax.jit(lfca_forward)(x, params))
    assert out.shape == (N, C, H, W), out.shape
    assert bool(jnp.all(jnp.isfinite(out)))

    ref = lfca_reference(x, params)
    err = float(jnp.max(jnp.abs(out - ref)))
    assert err < 2e-2, f"max abs error vs reference: {err}"
    print("KERNEL_OK")
</pallas_src>

<mosaic_0001>
module attributes {stable_mosaic.version = 11 : i64} {
  func.func @_lfca_kernel(%arg0: i32, %arg1: memref<8x256xf32, #tpu.memory_space<vmem>>, %arg2: memref<22x256xf32, #tpu.memory_space<vmem>>, %arg3: memref<2x4xf32, #tpu.memory_space<vmem>>, %arg4: memref<4x4xf32, #tpu.memory_space<vmem>>, %arg5: memref<4x25xf32, #tpu.memory_space<vmem>>, %arg6: memref<8x24xf32, #tpu.memory_space<vmem>>, %arg7: memref<2x4xf32, #tpu.memory_space<vmem>>, %arg8: memref<4x4xf32, #tpu.memory_space<vmem>>, %arg9: memref<4x25xf32, #tpu.memory_space<vmem>>, %arg10: memref<8x256xf32, #tpu.memory_space<vmem>>) attributes {dimension_semantics = [#tpu.dimension_semantics<parallel>], iteration_bounds = array<i64: 1>, scalar_prefetch = 0 : i64, scratch_operands = 0 : i64, tpu.core_type = #tpu.core_type<tc>, window_params = [{transform_indices = @transform_0, window_bounds = array<i64: 8, 256>}, {pipeline_mode = #tpu.pipeline_mode<synchronous>, transform_indices = @transform_1, window_bounds = array<i64: 22, 256>}, {pipeline_mode = #tpu.pipeline_mode<synchronous>, transform_indices = @transform_2, window_bounds = array<i64: 2, 4>}, {pipeline_mode = #tpu.pipeline_mode<synchronous>, transform_indices = @transform_3, window_bounds = array<i64: 4, 4>}, {pipeline_mode = #tpu.pipeline_mode<synchronous>, transform_indices = @transform_4, window_bounds = array<i64: 4, 25>}, {pipeline_mode = #tpu.pipeline_mode<synchronous>, transform_indices = @transform_5, window_bounds = array<i64: 8, 24>}, {pipeline_mode = #tpu.pipeline_mode<synchronous>, transform_indices = @transform_6, window_bounds = array<i64: 2, 4>}, {pipeline_mode = #tpu.pipeline_mode<synchronous>, transform_indices = @transform_7, window_bounds = array<i64: 4, 4>}, {pipeline_mode = #tpu.pipeline_mode<synchronous>, transform_indices = @transform_8, window_bounds = array<i64: 4, 25>}, {transform_indices = @transform_9, window_bounds = array<i64: 8, 256>}]} {
    %c0 = arith.constant 0 : index
    %c0_0 = arith.constant 0 : index
    %0 = vector.load %arg1[%c0, %c0_0] : memref<8x256xf32, #tpu.memory_space<vmem>>, vector<8x256xf32>
    %c0_1 = arith.constant 0 : index
    %c0_2 = arith.constant 0 : index
    %1 = vector.load %arg2[%c0_1, %c0_2] : memref<22x256xf32, #tpu.memory_space<vmem>>, vector<22x256xf32>
    %c3_i32 = arith.constant 3 : i32
    %2 = tpu.dynamic_rotate %0 by %c3_i32 dim 1 : vector<8x256xf32>, i32 -> vector<8x256xf32>
    %3 = vector.extract_strided_slice %1 {offsets = [13, 0], sizes = [1, 256], strides = [1, 1]} : vector<22x256xf32> to vector<1x256xf32>
    %4 = vector.broadcast %3 : vector<1x256xf32> to vector<8x256xf32>
    %5 = arith.mulf %2, %4 : vector<8x256xf32>
    %c2_i32 = arith.constant 2 : i32
    %6 = tpu.dynamic_rotate %0 by %c2_i32 dim 1 : vector<8x256xf32>, i32 -> vector<8x256xf32>
    %7 = vector.extract_strided_slice %1 {offsets = [14, 0], sizes = [1, 256], strides = [1, 1]} : vector<22x256xf32> to vector<1x256xf32>
    %8 = vector.broadcast %7 : vector<1x256xf32> to vector<8x256xf32>
    %9 = arith.mulf %6, %8 : vector<8x256xf32>
    %10 = arith.addf %5, %9 : vector<8x256xf32>
    %c1_i32 = arith.constant 1 : i32
    %11 = tpu.dynamic_rotate %0 by %c1_i32 dim 1 : vector<8x256xf32>, i32 -> vector<8x256xf32>
    %12 = vector.extract_strided_slice %1 {offsets = [15, 0], sizes = [1, 256], strides = [1, 1]} : vector<22x256xf32> to vector<1x256xf32>
    %13 = vector.broadcast %12 : vector<1x256xf32> to vector<8x256xf32>
    %14 = arith.mulf %11, %13 : vector<8x256xf32>
    %15 = arith.addf %10, %14 : vector<8x256xf32>
    %16 = arith.addf %15, %0 : vector<8x256xf32>
    %c255_i32 = arith.constant 255 : i32
    %17 = tpu.dynamic_rotate %0 by %c255_i32 dim 1 : vector<8x256xf32>, i32 -> vector<8x256xf32>
    %18 = vector.extract_strided_slice %1 {offsets = [17, 0], sizes = [1, 256], strides = [1, 1]} : vector<22x256xf32> to vector<1x256xf32>
    %19 = vector.broadcast %18 : vector<1x256xf32> to vector<8x256xf32>
    %20 = arith.mulf %17, %19 : vector<8x256xf32>
    %21 = arith.addf %16, %20 : vector<8x256xf32>
    %c254_i32 = arith.constant 254 : i32
    %22 = tpu.dynamic_rotate %0 by %c254_i32 dim 1 : vector<8x256xf32>, i32 -> vector<8x256xf32>
    %23 = vector.extract_strided_slice %1 {offsets = [18, 0], sizes = [1, 256], strides = [1, 1]} : vector<22x256xf32> to vector<1x256xf32>
    %24 = vector.broadcast %23 : vector<1x256xf32> to vector<8x256xf32>
    %25 = arith.mulf %22, %24 : vector<8x256xf32>
    %26 = arith.addf %21, %25 : vector<8x256xf32>
    %c253_i32 = arith.constant 253 : i32
    %27 = tpu.dynamic_rotate %0 by %c253_i32 dim 1 : vector<8x256xf32>, i32 -> vector<8x256xf32>
    %28 = vector.extract_strided_slice %1 {offsets = [19, 0], sizes = [1, 256], strides = [1, 1]} : vector<22x256xf32> to vector<1x256xf32>
    %29 = vector.broadcast %28 : vector<1x256xf32> to vector<8x256xf32>
    %30 = arith.mulf %27, %29 : vector<8x256xf32>
    %31 = arith.addf %26, %30 : vector<8x256xf32>
    %cst = arith.constant 0.142857149 : f32
    %32 = vector.broadcast %cst : f32 to vector<8x256xf32>
    %33 = arith.mulf %31, %32 : vector<8x256xf32>
    %c48_i32 = arith.constant 48 : i32
    %34 = tpu.dynamic_rotate %33 by %c48_i32 dim 1 : vector<8x256xf32>, i32 -> vector<8x256xf32>
    %35 = vector.extract_strided_slice %1 {offsets = [2, 0], sizes = [1, 256], strides = [1, 1]} : vector<22x256xf32> to vector<1x256xf32>
    %36 = vector.broadcast %35 : vector<1x256xf32> to vector<8x256xf32>
    %37 = arith.mulf %34, %36 : vector<8x256xf32>
    %c32_i32 = arith.constant 32 : i32
    %38 = tpu.dynamic_rotate %33 by %c32_i32 dim 1 : vector<8x256xf32>, i32 -> vector<8x256xf32>
    %39 = vector.extract_strided_slice %1 {offsets = [3, 0], sizes = [1, 256], strides = [1, 1]} : vector<22x256xf32> to vector<1x256xf32>
    %40 = vector.broadcast %39 : vector<1x256xf32> to vector<8x256xf32>
    %41 = arith.mulf %38, %40 : vector<8x256xf32>
    %42 = arith.addf %37, %41 : vector<8x256xf32>
    %c16_i32 = arith.constant 16 : i32
    %43 = tpu.dynamic_rotate %33 by %c16_i32 dim 1 : vector<8x256xf32>, i32 -> vector<8x256xf32>
    %44 = vector.extract_strided_slice %1 {offsets = [4, 0], sizes = [1, 256], strides = [1, 1]} : vector<22x256xf32> to vector<1x256xf32>
    %45 = vector.broadcast %44 : vector<1x256xf32> to vector<8x256xf32>
    %46 = arith.mulf %43, %45 : vector<8x256xf32>
    %47 = arith.addf %42, %46 : vector<8x256xf32>
    %48 = arith.addf %47, %33 : vector<8x256xf32>
    %c240_i32 = arith.constant 240 : i32
    %49 = tpu.dynamic_rotate %33 by %c240_i32 dim 1 : vector<8x256xf32>, i32 -> vector<8x256xf32>
    %50 = vector.extract_strided_slice %1 {offsets = [6, 0], sizes = [1, 256], strides = [1, 1]} : vector<22x256xf32> to vector<1x256xf32>
    %51 = vector.broadcast %50 : vector<1x256xf32> to vector<8x256xf32>
    %52 = arith.mulf %49, %51 : vector<8x256xf32>
    %53 = arith.addf %48, %52 : vector<8x256xf32>
    %c224_i32 = arith.constant 224 : i32
    %54 = tpu.dynamic_rotate %33 by %c224_i32 dim 1 : vector<8x256xf32>, i32 -> vector<8x256xf32>
    %55 = vector.extract_strided_slice %1 {offsets = [7, 0], sizes = [1, 256], strides = [1, 1]} : vector<22x256xf32> to vector<1x256xf32>
    %56 = vector.broadcast %55 : vector<1x256xf32> to vector<8x256xf32>
    %57 = arith.mulf %54, %56 : vector<8x256xf32>
    %58 = arith.addf %53, %57 : vector<8x256xf32>
    %c208_i32 = arith.constant 208 : i32
    %59 = tpu.dynamic_rotate %33 by %c208_i32 dim 1 : vector<8x256xf32>, i32 -> vector<8x256xf32>
    %60 = vector.extract_strided_slice %1 {offsets = [8, 0], sizes = [1, 256], strides = [1, 1]} : vector<22x256xf32> to vector<1x256xf32>
    %61 = vector.broadcast %60 : vector<1x256xf32> to vector<8x256xf32>
    %62 = arith.mulf %59, %61 : vector<8x256xf32>
    %63 = arith.addf %58, %62 : vector<8x256xf32>
    %cst_3 = arith.constant 0.142857149 : f32
    %64 = vector.broadcast %cst_3 : f32 to vector<8x256xf32>
    %65 = arith.mulf %63, %64 : vector<8x256xf32>
    %c0_4 = arith.constant 0 : index
    %c0_5 = arith.constant 0 : index
    %66 = vector.load %arg3[%c0_4, %c0_5] : memref<2x4xf32, #tpu.memory_space<vmem>>, vector<2x4xf32>
    %c0_6 = arith.constant 0 : index
    %c0_7 = arith.constant 0 : index
    %67 = vector.load %arg4[%c0_6, %c0_7] : memref<4x4xf32, #tpu.memory_space<vmem>>, vector<4x4xf32>
    %c0_8 = arith.constant 0 : index
    %c0_9 = arith.constant 0 : index
    %68 = vector.load %arg5[%c0_8, %c0_9] : memref<4x25xf32, #tpu.memory_space<vmem>>, vector<4x25xf32>
    %69 = vector.extract_strided_slice %65 {offsets = [0, 0], sizes = [4, 256], strides = [1, 1]} : vector<8x256xf32> to vector<4x256xf32>
    %70 = vector.extract_strided_slice %66 {offsets = [0, 0], sizes = [2, 1], strides = [1, 1]} : vector<2x4xf32> to vector<2x1xf32>
    %71 = vector.extract_strided_slice %69 {offsets = [0, 0], sizes = [1, 256], strides = [1, 1]} : vector<4x256xf32> to vector<1x256xf32>
    %72 = vector.broadcast %70 : vector<2x1xf32> to vector<2x256xf32>
    %73 = vector.broadcast %71 : vector<1x256xf32> to vector<2x256xf32>
    %74 = arith.mulf %72, %73 : vector<2x256xf32>
    %75 = vector.extract_strided_slice %66 {offsets = [0, 1], sizes = [2, 1], strides = [1, 1]} : vector<2x4xf32> to vector<2x1xf32>
    %76 = vector.extract_strided_slice %69 {offsets = [1, 0], sizes = [1, 256], strides = [1, 1]} : vector<4x256xf32> to vector<1x256xf32>
    %77 = vector.broadcast %75 : vector<2x1xf32> to vector<2x256xf32>
    %78 = vector.broadcast %76 : vector<1x256xf32> to vector<2x256xf32>
    %79 = arith.mulf %77, %78 : vector<2x256xf32>
    %80 = arith.addf %74, %79 : vector<2x256xf32>
    %81 = vector.extract_strided_slice %66 {offsets = [0, 2], sizes = [2, 1], strides = [1, 1]} : vector<2x4xf32> to vector<2x1xf32>
    %82 = vector.extract_strided_slice %69 {offsets = [2, 0], sizes = [1, 256], strides = [1, 1]} : vector<4x256xf32> to vector<1x256xf32>
    %83 = vector.broadcast %81 : vector<2x1xf32> to vector<2x256xf32>
    %84 = vector.broadcast %82 : vector<1x256xf32> to vector<2x256xf32>
    %85 = arith.mulf %83, %84 : vector<2x256xf32>
    %86 = arith.addf %80, %85 : vector<2x256xf32>
    %87 = vector.extract_strided_slice %66 {offsets = [0, 3], sizes = [2, 1], strides = [1, 1]} : vector<2x4xf32> to vector<2x1xf32>
    %88 = vector.extract_strided_slice %69 {offsets = [3, 0], sizes = [1, 256], strides = [1, 1]} : vector<4x256xf32> to vector<1x256xf32>
    %89 = vector.broadcast %87 : vector<2x1xf32> to vector<2x256xf32>
    %90 = vector.broadcast %88 : vector<1x256xf32> to vector<2x256xf32>
    %91 = arith.mulf %89, %90 : vector<2x256xf32>
    %92 = arith.addf %86, %91 : vector<2x256xf32>
    %93 = vector.extract_strided_slice %65 {offsets = [4, 0], sizes = [4, 256], strides = [1, 1]} : vector<8x256xf32> to vector<4x256xf32>
    %94 = vector.extract_strided_slice %66 {offsets = [0, 0], sizes = [2, 1], strides = [1, 1]} : vector<2x4xf32> to vector<2x1xf32>
    %95 = vector.extract_strided_slice %93 {offsets = [0, 0], sizes = [1, 256], strides = [1, 1]} : vector<4x256xf32> to vector<1x256xf32>
    %96 = vector.broadcast %94 : vector<2x1xf32> to vector<2x256xf32>
    %97 = vector.broadcast %95 : vector<1x256xf32> to vector<2x256xf32>
    %98 = arith.mulf %96, %97 : vector<2x256xf32>
    %99 = vector.extract_strided_slice %66 {offsets = [0, 1], sizes = [2, 1], strides = [1, 1]} : vector<2x4xf32> to vector<2x1xf32>
    %100 = vector.extract_strided_slice %93 {offsets = [1, 0], sizes = [1, 256], strides = [1, 1]} : vector<4x256xf32> to vector<1x256xf32>
    %101 = vector.broadcast %99 : vector<2x1xf32> to vector<2x256xf32>
    %102 = vector.broadcast %100 : vector<1x256xf32> to vector<2x256xf32>
    %103 = arith.mulf %101, %102 : vector<2x256xf32>
    %104 = arith.addf %98, %103 : vector<2x256xf32>
    %105 = vector.extract_strided_slice %66 {offsets = [0, 2], sizes = [2, 1], strides = [1, 1]} : vector<2x4xf32> to vector<2x1xf32>
    %106 = vector.extract_strided_slice %93 {offsets = [2, 0], sizes = [1, 256], strides = [1, 1]} : vector<4x256xf32> to vector<1x256xf32>
    %107 = vector.broadcast %105 : vector<2x1xf32> to vector<2x256xf32>
    %108 = vector.broadcast %106 : vector<1x256xf32> to vector<2x256xf32>
    %109 = arith.mulf %107, %108 : vector<2x256xf32>
    %110 = arith.addf %104, %109 : vector<2x256xf32>
    %111 = vector.extract_strided_slice %66 {offsets = [0, 3], sizes = [2, 1], strides = [1, 1]} : vector<2x4xf32> to vector<2x1xf32>
    %112 = vector.extract_strided_slice %93 {offsets = [3, 0], sizes = [1, 256], strides = [1, 1]} : vector<4x256xf32> to vector<1x256xf32>
    %113 = vector.broadcast %111 : vector<2x1xf32> to vector<2x256xf32>
    %114 = vector.broadcast %112 : vector<1x256xf32> to vector<2x256xf32>
    %115 = arith.mulf %113, %114 : vector<2x256xf32>
    %116 = arith.addf %110, %115 : vector<2x256xf32>
    %117 = tpu.concatenate %92, %116 in 0 : vector<2x256xf32>, vector<2x256xf32> -> vector<4x256xf32>
    %118 = vector.extract_strided_slice %67 {offsets = [0, 0], sizes = [4, 1], strides = [1, 1]} : vector<4x4xf32> to vector<4x1xf32>
    %119 = vector.broadcast %118 : vector<4x1xf32> to vector<4x256xf32>
    %120 = arith.mulf %117, %119 : vector<4x256xf32>
    %121 = vector.extract_strided_slice %67 {offsets = [0, 1], sizes = [4, 1], strides = [1, 1]} : vector<4x4xf32> to vector<4x1xf32>
    %122 = vector.broadcast %121 : vector<4x1xf32> to vector<4x256xf32>
    %123 = arith.addf %120, %122 : vector<4x256xf32>
    %cst_10 = arith.constant 0.000000e+00 : f32
    %124 = vector.broadcast %cst_10 : f32 to vector<4x256xf32>
    %125 = arith.subf %124, %123 : vector<4x256xf32>
    %126 = math.exp %125 : vector<4x256xf32>
    %cst_11 = arith.constant 1.000000e+00 : f32
    %127 = vector.broadcast %cst_11 : f32 to vector<4x256xf32>
    %128 = arith.addf %127, %126 : vector<4x256xf32>
    %129 = tpu.reciprocal %128 {approx = true} : vector<4x256xf32> -> vector<4x256xf32>
    %130 = arith.mulf %123, %129 : vector<4x256xf32>
    %c2_i32_12 = arith.constant 2 : i32
    %131 = tpu.dynamic_rotate %130 by %c2_i32_12 dim 1 : vector<4x256xf32>, i32 -> vector<4x256xf32>
    %132 = vector.extract_strided_slice %1 {offsets = [14, 0], sizes = [1, 256], strides = [1, 1]} : vector<22x256xf32> to vector<1x256xf32>
    %133 = vector.broadcast %132 : vector<1x256xf32> to vector<4x256xf32>
    %134 = arith.mulf %131, %133 : vector<4x256xf32>
    %c1_i32_13 = arith.constant 1 : i32
    %135 = tpu.dynamic_rotate %130 by %c1_i32_13 dim 1 : vector<4x256xf32>, i32 -> vector<4x256xf32>
    %136 = vector.extract_strided_slice %1 {offsets = [15, 0], sizes = [1, 256], strides = [1, 1]} : vector<22x256xf32> to vector<1x256xf32>
    %137 = vector.broadcast %136 : vector<1x256xf32> to vector<4x256xf32>
    %138 = arith.mulf %135, %137 : vector<4x256xf32>
    %c255_i32_14 = arith.constant 255 : i32
    %139 = tpu.dynamic_rotate %130 by %c255_i32_14 dim 1 : vector<4x256xf32>, i32 -> vector<4x256xf32>
    %140 = vector.extract_strided_slice %1 {offsets = [17, 0], sizes = [1, 256], strides = [1, 1]} : vector<22x256xf32> to vector<1x256xf32>
    %141 = vector.broadcast %140 : vector<1x256xf32> to vector<4x256xf32>
    %142 = arith.mulf %139, %141 : vector<4x256xf32>
    %c254_i32_15 = arith.constant 254 : i32
    %143 = tpu.dynamic_rotate %130 by %c254_i32_15 dim 1 : vector<4x256xf32>, i32 -> vector<4x256xf32>
    %144 = vector.extract_strided_slice %1 {offsets = [18, 0], sizes = [1, 256], strides = [1, 1]} : vector<22x256xf32> to vector<1x256xf32>
    %145 = vector.broadcast %144 : vector<1x256xf32> to vector<4x256xf32>
    %146 = arith.mulf %143, %145 : vector<4x256xf32>
    %147 = vector.extract_strided_slice %68 {offsets = [0, 0], sizes = [4, 1], strides = [1, 1]} : vector<4x25xf32> to vector<4x1xf32>
    %148 = vector.broadcast %147 : vector<4x1xf32> to vector<4x256xf32>
    %149 = arith.mulf %148, %134 : vector<4x256xf32>
    %150 = vector.extract_strided_slice %68 {offsets = [0, 1], sizes = [4, 1], strides = [1, 1]} : vector<4x25xf32> to vector<4x1xf32>
    %151 = vector.broadcast %150 : vector<4x1xf32> to vector<4x256xf32>
    %152 = arith.mulf %151, %138 : vector<4x256xf32>
    %153 = arith.addf %149, %152 : vector<4x256xf32>
    %154 = vector.extract_strided_slice %68 {offsets = [0, 2], sizes = [4, 1], strides = [1, 1]} : vector<4x25xf32> to vector<4x1xf32>
    %155 = vector.broadcast %154 : vector<4x1xf32> to vector<4x256xf32>
    %156 = arith.mulf %155, %130 : vector<4x256xf32>
    %157 = arith.addf %153, %156 : vector<4x256xf32>
    %158 = vector.extract_strided_slice %68 {offsets = [0, 3], sizes = [4, 1], strides = [1, 1]} : vector<4x25xf32> to vector<4x1xf32>
    %159 = vector.broadcast %158 : vector<4x1xf32> to vector<4x256xf32>
    %160 = arith.mulf %159, %142 : vector<4x256xf32>
    %161 = arith.addf %157, %160 : vector<4x256xf32>
    %162 = vector.extract_strided_slice %68 {offsets = [0, 4], sizes = [4, 1], strides = [1, 1]} : vector<4x25xf32> to vector<4x1xf32>
    %163 = vector.broadcast %162 : vector<4x1xf32> to vector<4x256xf32>
    %164 = arith.mulf %163, %146 : vector<4x256xf32>
    %165 = arith.addf %161, %164 : vector<4x256xf32>
    %c32_i32_16 = arith.constant 32 : i32
    %166 = tpu.dynamic_rotate %165 by %c32_i32_16 dim 1 : vector<4x256xf32>, i32 -> vector<4x256xf32>
    %167 = vector.extract_strided_slice %1 {offsets = [3, 0], sizes = [1, 256], strides = [1, 1]} : vector<22x256xf32> to vector<1x256xf32>
    %168 = vector.broadcast %167 : vector<1x256xf32> to vector<4x256xf32>
    %169 = arith.mulf %166, %168 : vector<4x256xf32>
    %170 = vector.extract_strided_slice %68 {offsets = [0, 5], sizes = [4, 1], strides = [1, 1]} : vector<4x25xf32> to vector<4x1xf32>
    %171 = vector.broadcast %170 : vector<4x1xf32> to vector<4x256xf32>
    %172 = arith.mulf %171, %134 : vector<4x256xf32>
    %173 = vector.extract_strided_slice %68 {offsets = [0, 6], sizes = [4, 1], strides = [1, 1]} : vector<4x25xf32> to vector<4x1xf32>
    %174 = vector.broadcast %173 : vector<4x1xf32> to vector<4x256xf32>
    %175 = arith.mulf %174, %138 : vector<4x256xf32>
    %176 = arith.addf %172, %175 : vector<4x256xf32>
    %177 = vector.extract_strided_slice %68 {offsets = [0, 7], sizes = [4, 1], strides = [1, 1]} : vector<4x25xf32> to vector<4x1xf32>
    %178 = vector.broadcast %177 : vector<4x1xf32> to vector<4x256xf32>
    %179 = arith.mulf %178, %130 : vector<4x256xf32>
    %180 = arith.addf %176, %179 : vector<4x256xf32>
    %181 = vector.extract_strided_slice %68 {offsets = [0, 8], sizes = [4, 1], strides = [1, 1]} : vector<4x25xf32> to vector<4x1xf32>
    %182 = vector.broadcast %181 : vector<4x1xf32> to vector<4x256xf32>
    %183 = arith.mulf %182, %142 : vector<4x256xf32>
    %184 = arith.addf %180, %183 : vector<4x256xf32>
    %185 = vector.extract_strided_slice %68 {offsets = [0, 9], sizes = [4, 1], strides = [1, 1]} : vector<4x25xf32> to vector<4x1xf32>
    %186 = vector.broadcast %185 : vector<4x1xf32> to vector<4x256xf32>
    %187 = arith.mulf %186, %146 : vector<4x256xf32>
    %188 = arith.addf %184, %187 : vector<4x256xf32>
    %c16_i32_17 = arith.constant 16 : i32
    %189 = tpu.dynamic_rotate %188 by %c16_i32_17 dim 1 : vector<4x256xf32>, i32 -> vector<4x256xf32>
    %190 = vector.extract_strided_slice %1 {offsets = [4, 0], sizes = [1, 256], strides = [1, 1]} : vector<22x256xf32> to vector<1x256xf32>
    %191 = vector.broadcast %190 : vector<1x256xf32> to vector<4x256xf32>
    %192 = arith.mulf %189, %191 : vector<4x256xf32>
    %193 = arith.addf %169, %192 : vector<4x256xf32>
    %194 = vector.extract_strided_slice %68 {offsets = [0, 10], sizes = [4, 1], strides = [1, 1]} : vector<4x25xf32> to vector<4x1xf32>
    %195 = vector.broadcast %194 : vector<4x1xf32> to vector<4x256xf32>
    %196 = arith.mulf %195, %134 : vector<4x256xf32>
    %197 = vector.extract_strided_slice %68 {offsets = [0, 11], sizes = [4, 1], strides = [1, 1]} : vector<4x25xf32> to vector<4x1xf32>
    %198 = vector.broadcast %197 : vector<4x1xf32> to vector<4x256xf32>
    %199 = arith.mulf %198, %138 : vector<4x256xf32>
    %200 = arith.addf %196, %199 : vector<4x256xf32>
    %201 = vector.extract_strided_slice %68 {offsets = [0, 12], sizes = [4, 1], strides = [1, 1]} : vector<4x25xf32> to vector<4x1xf32>
    %202 = vector.broadcast %201 : vector<4x1xf32> to vector<4x256xf32>
    %203 = arith.mulf %202, %130 : vector<4x256xf32>
    %204 = arith.addf %200, %203 : vector<4x256xf32>
    %205 = vector.extract_strided_slice %68 {offsets = [0, 13], sizes = [4, 1], strides = [1, 1]} : vector<4x25xf32> to vector<4x1xf32>
    %206 = vector.broadcast %205 : vector<4x1xf32> to vector<4x256xf32>
    %207 = arith.mulf %206, %142 : vector<4x256xf32>
    %208 = arith.addf %204, %207 : vector<4x256xf32>
    %209 = vector.extract_strided_slice %68 {offsets = [0, 14], sizes = [4, 1], strides = [1, 1]} : vector<4x25xf32> to vector<4x1xf32>
    %210 = vector.broadcast %209 : vector<4x1xf32> to vector<4x256xf32>
    %211 = arith.mulf %210, %146 : vector<4x256xf32>
    %212 = arith.addf %208, %211 : vector<4x256xf32>
    %213 = arith.addf %193, %212 : vector<4x256xf32>
    %214 = vector.extract_strided_slice %68 {offsets = [0, 15], sizes = [4, 1], strides = [1, 1]} : vector<4x25xf32> to vector<4x1xf32>
    %215 = vector.broadcast %214 : vector<4x1xf32> to vector<4x256xf32>
    %216 = arith.mulf %215, %134 : vector<4x256xf32>
    %217 = vector.extract_strided_slice %68 {offsets = [0, 16], sizes = [4, 1], strides = [1, 1]} : vector<4x25xf32> to vector<4x1xf32>
    %218 = vector.broadcast %217 : vector<4x1xf32> to vector<4x256xf32>
    %219 = arith.mulf %218, %138 : vector<4x256xf32>
    %220 = arith.addf %216, %219 : vector<4x256xf32>
    %221 = vector.extract_strided_slice %68 {offsets = [0, 17], sizes = [4, 1], strides = [1, 1]} : vector<4x25xf32> to vector<4x1xf32>
    %222 = vector.broadcast %221 : vector<4x1xf32> to vector<4x256xf32>
    %223 = arith.mulf %222, %130 : vector<4x256xf32>
    %224 = arith.addf %220, %223 : vector<4x256xf32>
    %225 = vector.extract_strided_slice %68 {offsets = [0, 18], sizes = [4, 1], strides = [1, 1]} : vector<4x25xf32> to vector<4x1xf32>
    %226 = vector.broadcast %225 : vector<4x1xf32> to vector<4x256xf32>
    %227 = arith.mulf %226, %142 : vector<4x256xf32>
    %228 = arith.addf %224, %227 : vector<4x256xf32>
    %229 = vector.extract_strided_slice %68 {offsets = [0, 19], sizes = [4, 1], strides = [1, 1]} : vector<4x25xf32> to vector<4x1xf32>
    %230 = vector.broadcast %229 : vector<4x1xf32> to vector<4x256xf32>
    %231 = arith.mulf %230, %146 : vector<4x256xf32>
    %232 = arith.addf %228, %231 : vector<4x256xf32>
    %c240_i32_18 = arith.constant 240 : i32
    %233 = tpu.dynamic_rotate %232 by %c240_i32_18 dim 1 : vector<4x256xf32>, i32 -> vector<4x256xf32>
    %234 = vector.extract_strided_slice %1 {offsets = [6, 0], sizes = [1, 256], strides = [1, 1]} : vector<22x256xf32> to vector<1x256xf32>
    %235 = vector.broadcast %234 : vector<1x256xf32> to vector<4x256xf32>
    %236 = arith.mulf %233, %235 : vector<4x256xf32>
    %237 = arith.addf %213, %236 : vector<4x256xf32>
    %238 = vector.extract_strided_slice %68 {offsets = [0, 20], sizes = [4, 1], strides = [1, 1]} : vector<4x25xf32> to vector<4x1xf32>
    %239 = vector.broadcast %238 : vector<4x1xf32> to vector<4x256xf32>
    %240 = arith.mulf %239, %134 : vector<4x256xf32>
    %241 = vector.extract_strided_slice %68 {offsets = [0, 21], sizes = [4, 1], strides = [1, 1]} : vector<4x25xf32> to vector<4x1xf32>
    %242 = vector.broadcast %241 : vector<4x1xf32> to vector<4x256xf32>
    %243 = arith.mulf %242, %138 : vector<4x256xf32>
    %244 = arith.addf %240, %243 : vector<4x256xf32>
    %245 = vector.extract_strided_slice %68 {offsets = [0, 22], sizes = [4, 1], strides = [1, 1]} : vector<4x25xf32> to vector<4x1xf32>
    %246 = vector.broadcast %245 : vector<4x1xf32> to vector<4x256xf32>
    %247 = arith.mulf %246, %130 : vector<4x256xf32>
    %248 = arith.addf %244, %247 : vector<4x256xf32>
    %249 = vector.extract_strided_slice %68 {offsets = [0, 23], sizes = [4, 1], strides = [1, 1]} : vector<4x25xf32> to vector<4x1xf32>
    %250 = vector.broadcast %249 : vector<4x1xf32> to vector<4x256xf32>
    %251 = arith.mulf %250, %142 : vector<4x256xf32>
    %252 = arith.addf %248, %251 : vector<4x256xf32>
    %253 = vector.extract_strided_slice %68 {offsets = [0, 24], sizes = [4, 1], strides = [1, 1]} : vector<4x25xf32> to vector<4x1xf32>
    %254 = vector.broadcast %253 : vector<4x1xf32> to vector<4x256xf32>
    %255 = arith.mulf %254, %146 : vector<4x256xf32>
    %256 = arith.addf %252, %255 : vector<4x256xf32>
    %c224_i32_19 = arith.constant 224 : i32
    %257 = tpu.dynamic_rotate %256 by %c224_i32_19 dim 1 : vector<4x256xf32>, i32 -> vector<4x256xf32>
    %258 = vector.extract_strided_slice %1 {offsets = [7, 0], sizes = [1, 256], strides = [1, 1]} : vector<22x256xf32> to vector<1x256xf32>
    %259 = vector.broadcast %258 : vector<1x256xf32> to vector<4x256xf32>
    %260 = arith.mulf %257, %259 : vector<4x256xf32>
    %261 = arith.addf %237, %260 : vector<4x256xf32>
    %262 = vector.extract_strided_slice %67 {offsets = [0, 2], sizes = [4, 1], strides = [1, 1]} : vector<4x4xf32> to vector<4x1xf32>
    %263 = vector.broadcast %262 : vector<4x1xf32> to vector<4x256xf32>
    %264 = arith.mulf %261, %263 : vector<4x256xf32>
    %265 = vector.extract_strided_slice %67 {offsets = [0, 3], sizes = [4, 1], strides = [1, 1]} : vector<4x4xf32> to vector<4x1xf32>
    %266 = vector.broadcast %265 : vector<4x1xf32> to vector<4x256xf32>
    %267 = arith.addf %264, %266 : vector<4x256xf32>
    %cst_20 = arith.constant 0.000000e+00 : f32
    %268 = vector.broadcast %cst_20 : f32 to vector<4x256xf32>
    %269 = arith.subf %268, %267 : vector<4x256xf32>
    %270 = math.exp %269 : vector<4x256xf32>
    %cst_21 = arith.constant 1.000000e+00 : f32
    %271 = vector.broadcast %cst_21 : f32 to vector<4x256xf32>
    %272 = arith.addf %271, %270 : vector<4x256xf32>
    %273 = tpu.reciprocal %272 {approx = true} : vector<4x256xf32> -> vector<4x256xf32>
    %274 = arith.mulf %267, %273 : vector<4x256xf32>
    %275 = vector.extract_strided_slice %130 {offsets = [0, 0], sizes = [2, 256], strides = [1, 1]} : vector<4x256xf32> to vector<2x256xf32>
    %276 = vector.extract_strided_slice %274 {offsets = [0, 0], sizes = [2, 256], strides = [1, 1]} : vector<4x256xf32> to vector<2x256xf32>
    %277 = vector.extract_strided_slice %130 {offsets = [2, 0], sizes = [2, 256], strides = [1, 1]} : vector<4x256xf32> to vector<2x256xf32>
    %278 = vector.extract_strided_slice %274 {offsets = [2, 0], sizes = [2, 256], strides = [1, 1]} : vector<4x256xf32> to vector<2x256xf32>
    %279 = tpu.concatenate %275, %276, %277, %278 in 0 : vector<2x256xf32>, vector<2x256xf32>, vector<2x256xf32>, vector<2x256xf32> -> vector<8x256xf32>
    %c0_22 = arith.constant 0 : index
    %c0_23 = arith.constant 0 : index
    %280 = vector.load %arg6[%c0_22, %c0_23] : memref<8x24xf32, #tpu.memory_space<vmem>>, vector<8x24xf32>
    %281 = vector.extract_strided_slice %280 {offsets = [0, 0], sizes = [8, 11], strides = [1, 1]} : vector<8x24xf32> to vector<8x11xf32>
    %282 = vector.extract_strided_slice %281 {offsets = [0, 0], sizes = [8, 1], strides = [1, 1]} : vector<8x11xf32> to vector<8x1xf32>
    %c5_i32 = arith.constant 5 : i32
    %283 = tpu.dynamic_rotate %279 by %c5_i32 dim 1 : vector<8x256xf32>, i32 -> vector<8x256xf32>
    %284 = vector.extract_strided_slice %1 {offsets = [11, 0], sizes = [1, 256], strides = [1, 1]} : vector<22x256xf32> to vector<1x256xf32>
    %285 = vector.broadcast %284 : vector<1x256xf32> to vector<8x256xf32>
    %286 = arith.mulf %283, %285 : vector<8x256xf32>
    %287 = vector.broadcast %282 : vector<8x1xf32> to vector<8x256xf32>
    %288 = arith.mulf %287, %286 : vector<8x256xf32>
    %289 = vector.extract_strided_slice %281 {offsets = [0, 1], sizes = [8, 1], strides = [1, 1]} : vector<8x11xf32> to vector<8x1xf32>
    %c4_i32 = arith.constant 4 : i32
    %290 = tpu.dynamic_rotate %279 by %c4_i32 dim 1 : vector<8x256xf32>, i32 -> vector<8x256xf32>
    %291 = vector.extract_strided_slice %1 {offsets = [12, 0], sizes = [1, 256], strides = [1, 1]} : vector<22x256xf32> to vector<1x256xf32>
    %292 = vector.broadcast %291 : vector<1x256xf32> to vector<8x256xf32>
    %293 = arith.mulf %290, %292 : vector<8x256xf32>
    %294 = vector.broadcast %289 : vector<8x1xf32> to vector<8x256xf32>
    %295 = arith.mulf %294, %293 : vector<8x256xf32>
    %296 = arith.addf %288, %295 : vector<8x256xf32>
    %297 = vector.extract_strided_slice %281 {offsets = [0, 2], sizes = [8, 1], strides = [1, 1]} : vector<8x11xf32> to vector<8x1xf32>
    %c3_i32_24 = arith.constant 3 : i32
    %298 = tpu.dynamic_rotate %279 by %c3_i32_24 dim 1 : vector<8x256xf32>, i32 -> vector<8x256xf32>
    %299 = vector.extract_strided_slice %1 {offsets = [13, 0], sizes = [1, 256], strides = [1, 1]} : vector<22x256xf32> to vector<1x256xf32>
    %300 = vector.broadcast %299 : vector<1x256xf32> to vector<8x256xf32>
    %301 = arith.mulf %298, %300 : vector<8x256xf32>
    %302 = vector.broadcast %297 : vector<8x1xf32> to vector<8x256xf32>
    %303 = arith.mulf %302, %301 : vector<8x256xf32>
    %304 = arith.addf %296, %303 : vector<8x256xf32>
    %305 = vector.extract_strided_slice %281 {offsets = [0, 3], sizes = [8, 1], strides = [1, 1]} : vector<8x11xf32> to vector<8x1xf32>
    %c2_i32_25 = arith.constant 2 : i32
    %306 = tpu.dynamic_rotate %279 by %c2_i32_25 dim 1 : vector<8x256xf32>, i32 -> vector<8x256xf32>
    %307 = vector.extract_strided_slice %1 {offsets = [14, 0], sizes = [1, 256], strides = [1, 1]} : vector<22x256xf32> to vector<1x256xf32>
    %308 = vector.broadcast %307 : vector<1x256xf32> to vector<8x256xf32>
    %309 = arith.mulf %306, %308 : vector<8x256xf32>
    %310 = vector.broadcast %305 : vector<8x1xf32> to vector<8x256xf32>
    %311 = arith.mulf %310, %309 : vector<8x256xf32>
    %312 = arith.addf %304, %311 : vector<8x256xf32>
    %313 = vector.extract_strided_slice %281 {offsets = [0, 4], sizes = [8, 1], strides = [1, 1]} : vector<8x11xf32> to vector<8x1xf32>
    %c1_i32_26 = arith.constant 1 : i32
    %314 = tpu.dynamic_rotate %279 by %c1_i32_26 dim 1 : vector<8x256xf32>, i32 -> vector<8x256xf32>
    %315 = vector.extract_strided_slice %1 {offsets = [15, 0], sizes = [1, 256], strides = [1, 1]} : vector<22x256xf32> to vector<1x256xf32>
    %316 = vector.broadcast %315 : vector<1x256xf32> to vector<8x256xf32>
    %317 = arith.mulf %314, %316 : vector<8x256xf32>
    %318 = vector.broadcast %313 : vector<8x1xf32> to vector<8x256xf32>
    %319 = arith.mulf %318, %317 : vector<8x256xf32>
    %320 = arith.addf %312, %319 : vector<8x256xf32>
    %321 = vector.extract_strided_slice %281 {offsets = [0, 5], sizes = [8, 1], strides = [1, 1]} : vector<8x11xf32> to vector<8x1xf32>
    %322 = vector.broadcast %321 : vector<8x1xf32> to vector<8x256xf32>
    %323 = arith.mulf %322, %279 : vector<8x256xf32>
    %324 = arith.addf %320, %323 : vector<8x256xf32>
    %325 = vector.extract_strided_slice %281 {offsets = [0, 6], sizes = [8, 1], strides = [1, 1]} : vector<8x11xf32> to vector<8x1xf32>
    %c255_i32_27 = arith.constant 255 : i32
    %326 = tpu.dynamic_rotate %279 by %c255_i32_27 dim 1 : vector<8x256xf32>, i32 -> vector<8x256xf32>
    %327 = vector.extract_strided_slice %1 {offsets = [17, 0], sizes = [1, 256], strides = [1, 1]} : vector<22x256xf32> to vector<1x256xf32>
    %328 = vector.broadcast %327 : vector<1x256xf32> to vector<8x256xf32>
    %329 = arith.mulf %326, %328 : vector<8x256xf32>
    %330 = vector.broadcast %325 : vector<8x1xf32> to vector<8x256xf32>
    %331 = arith.mulf %330, %329 : vector<8x256xf32>
    %332 = arith.addf %324, %331 : vector<8x256xf32>
    %333 = vector.extract_strided_slice %281 {offsets = [0, 7], sizes = [8, 1], strides = [1, 1]} : vector<8x11xf32> to vector<8x1xf32>
    %c254_i32_28 = arith.constant 254 : i32
    %334 = tpu.dynamic_rotate %279 by %c254_i32_28 dim 1 : vector<8x256xf32>, i32 -> vector<8x256xf32>
    %335 = vector.extract_strided_slice %1 {offsets = [18, 0], sizes = [1, 256], strides = [1, 1]} : vector<22x256xf32> to vector<1x256xf32>
    %336 = vector.broadcast %335 : vector<1x256xf32> to vector<8x256xf32>
    %337 = arith.mulf %334, %336 : vector<8x256xf32>
    %338 = vector.broadcast %333 : vector<8x1xf32> to vector<8x256xf32>
    %339 = arith.mulf %338, %337 : vector<8x256xf32>
    %340 = arith.addf %332, %339 : vector<8x256xf32>
    %341 = vector.extract_strided_slice %281 {offsets = [0, 8], sizes = [8, 1], strides = [1, 1]} : vector<8x11xf32> to vector<8x1xf32>
    %c253_i32_29 = arith.constant 253 : i32
    %342 = tpu.dynamic_rotate %279 by %c253_i32_29 dim 1 : vector<8x256xf32>, i32 -> vector<8x256xf32>
    %343 = vector.extract_strided_slice %1 {offsets = [19, 0], sizes = [1, 256], strides = [1, 1]} : vector<22x256xf32> to vector<1x256xf32>
    %344 = vector.broadcast %343 : vector<1x256xf32> to vector<8x256xf32>
    %345 = arith.mulf %342, %344 : vector<8x256xf32>
    %346 = vector.broadcast %341 : vector<8x1xf32> to vector<8x256xf32>
    %347 = arith.mulf %346, %345 : vector<8x256xf32>
    %348 = arith.addf %340, %347 : vector<8x256xf32>
    %349 = vector.extract_strided_slice %281 {offsets = [0, 9], sizes = [8, 1], strides = [1, 1]} : vector<8x11xf32> to vector<8x1xf32>
    %c252_i32 = arith.constant 252 : i32
    %350 = tpu.dynamic_rotate %279 by %c252_i32 dim 1 : vector<8x256xf32>, i32 -> vector<8x256xf32>
    %351 = vector.extract_strided_slice %1 {offsets = [20, 0], sizes = [1, 256], strides = [1, 1]} : vector<22x256xf32> to vector<1x256xf32>
    %352 = vector.broadcast %351 : vector<1x256xf32> to vector<8x256xf32>
    %353 = arith.mulf %350, %352 : vector<8x256xf32>
    %354 = vector.broadcast %349 : vector<8x1xf32> to vector<8x256xf32>
    %355 = arith.mulf %354, %353 : vector<8x256xf32>
    %356 = arith.addf %348, %355 : vector<8x256xf32>
    %357 = vector.extract_strided_slice %281 {offsets = [0, 10], sizes = [8, 1], strides = [1, 1]} : vector<8x11xf32> to vector<8x1xf32>
    %c251_i32 = arith.constant 251 : i32
    %358 = tpu.dynamic_rotate %279 by %c251_i32 dim 1 : vector<8x256xf32>, i32 -> vector<8x256xf32>
    %359 = vector.extract_strided_slice %1 {offsets = [21, 0], sizes = [1, 256], strides = [1, 1]} : vector<22x256xf32> to vector<1x256xf32>
    %360 = vector.broadcast %359 : vector<1x256xf32> to vector<8x256xf32>
    %361 = arith.mulf %358, %360 : vector<8x256xf32>
    %362 = vector.broadcast %357 : vector<8x1xf32> to vector<8x256xf32>
    %363 = arith.mulf %362, %361 : vector<8x256xf32>
    %364 = arith.addf %356, %363 : vector<8x256xf32>
    %365 = vector.extract_strided_slice %280 {offsets = [0, 11], sizes = [8, 1], strides = [1, 1]} : vector<8x24xf32> to vector<8x1xf32>
    %366 = vector.broadcast %365 : vector<8x1xf32> to vector<8x256xf32>
    %367 = arith.addf %364, %366 : vector<8x256xf32>
    %368 = vector.extract_strided_slice %280 {offsets = [0, 12], sizes = [8, 11], strides = [1, 1]} : vector<8x24xf32> to vector<8x11xf32>
    %369 = vector.extract_strided_slice %368 {offsets = [0, 0], sizes = [8, 1], strides = [1, 1]} : vector<8x11xf32> to vector<8x1xf32>
    %c80_i32 = arith.constant 80 : i32
    %370 = tpu.dynamic_rotate %367 by %c80_i32 dim 1 : vector<8x256xf32>, i32 -> vector<8x256xf32>
    %371 = vector.extract_strided_slice %1 {offsets = [0, 0], sizes = [1, 256], strides = [1, 1]} : vector<22x256xf32> to vector<1x256xf32>
    %372 = vector.broadcast %371 : vector<1x256xf32> to vector<8x256xf32>
    %373 = arith.mulf %370, %372 : vector<8x256xf32>
    %374 = vector.broadcast %369 : vector<8x1xf32> to vector<8x256xf32>
    %375 = arith.mulf %374, %373 : vector<8x256xf32>
    %376 = vector.extract_strided_slice %368 {offsets = [0, 1], sizes = [8, 1], strides = [1, 1]} : vector<8x11xf32> to vector<8x1xf32>
    %c64_i32 = arith.constant 64 : i32
    %377 = tpu.dynamic_rotate %367 by %c64_i32 dim 1 : vector<8x256xf32>, i32 -> vector<8x256xf32>
    %378 = vector.extract_strided_slice %1 {offsets = [1, 0], sizes = [1, 256], strides = [1, 1]} : vector<22x256xf32> to vector<1x256xf32>
    %379 = vector.broadcast %378 : vector<1x256xf32> to vector<8x256xf32>
    %380 = arith.mulf %377, %379 : vector<8x256xf32>
    %381 = vector.broadcast %376 : vector<8x1xf32> to vector<8x256xf32>
    %382 = arith.mulf %381, %380 : vector<8x256xf32>
    %383 = arith.addf %375, %382 : vector<8x256xf32>
    %384 = vector.extract_strided_slice %368 {offsets = [0, 2], sizes = [8, 1], strides = [1, 1]} : vector<8x11xf32> to vector<8x1xf32>
    %c48_i32_30 = arith.constant 48 : i32
    %385 = tpu.dynamic_rotate %367 by %c48_i32_30 dim 1 : vector<8x256xf32>, i32 -> vector<8x256xf32>
    %386 = vector.extract_strided_slice %1 {offsets = [2, 0], sizes = [1, 256], strides = [1, 1]} : vector<22x256xf32> to vector<1x256xf32>
    %387 = vector.broadcast %386 : vector<1x256xf32> to vector<8x256xf32>
    %388 = arith.mulf %385, %387 : vector<8x256xf32>
    %389 = vector.broadcast %384 : vector<8x1xf32> to vector<8x256xf32>
    %390 = arith.mulf %389, %388 : vector<8x256xf32>
    %391 = arith.addf %383, %390 : vector<8x256xf32>
    %392 = vector.extract_strided_slice %368 {offsets = [0, 3], sizes = [8, 1], strides = [1, 1]} : vector<8x11xf32> to vector<8x1xf32>
    %c32_i32_31 = arith.constant 32 : i32
    %393 = tpu.dynamic_rotate %367 by %c32_i32_31 dim 1 : vector<8x256xf32>, i32 -> vector<8x256xf32>
    %394 = vector.extract_strided_slice %1 {offsets = [3, 0], sizes = [1, 256], strides = [1, 1]} : vector<22x256xf32> to vector<1x256xf32>
    %395 = vector.broadcast %394 : vector<1x256xf32> to vector<8x256xf32>
    %396 = arith.mulf %393, %395 : vector<8x256xf32>
    %397 = vector.broadcast %392 : vector<8x1xf32> to vector<8x256xf32>
    %398 = arith.mulf %397, %396 : vector<8x256xf32>
    %399 = arith.addf %391, %398 : vector<8x256xf32>
    %400 = vector.extract_strided_slice %368 {offsets = [0, 4], sizes = [8, 1], strides = [1, 1]} : vector<8x11xf32> to vector<8x1xf32>
    %c16_i32_32 = arith.constant 16 : i32
    %401 = tpu.dynamic_rotate %367 by %c16_i32_32 dim 1 : vector<8x256xf32>, i32 -> vector<8x256xf32>
    %402 = vector.extract_strided_slice %1 {offsets = [4, 0], sizes = [1, 256], strides = [1, 1]} : vector<22x256xf32> to vector<1x256xf32>
    %403 = vector.broadcast %402 : vector<1x256xf32> to vector<8x256xf32>
    %404 = arith.mulf %401, %403 : vector<8x256xf32>
    %405 = vector.broadcast %400 : vector<8x1xf32> to vector<8x256xf32>
    %406 = arith.mulf %405, %404 : vector<8x256xf32>
    %407 = arith.addf %399, %406 : vector<8x256xf32>
    %408 = vector.extract_strided_slice %368 {offsets = [0, 5], sizes = [8, 1], strides = [1, 1]} : vector<8x11xf32> to vector<8x1xf32>
    %409 = vector.broadcast %408 : vector<8x1xf32> to vector<8x256xf32>
    %410 = arith.mulf %409, %367 : vector<8x256xf32>
    %411 = arith.addf %407, %410 : vector<8x256xf32>
    %412 = vector.extract_strided_slice %368 {offsets = [0, 6], sizes = [8, 1], strides = [1, 1]} : vector<8x11xf32> to vector<8x1xf32>
    %c240_i32_33 = arith.constant 240 : i32
    %413 = tpu.dynamic_rotate %367 by %c240_i32_33 dim 1 : vector<8x256xf32>, i32 -> vector<8x256xf32>
    %414 = vector.extract_strided_slice %1 {offsets = [6, 0], sizes = [1, 256], strides = [1, 1]} : vector<22x256xf32> to vector<1x256xf32>
    %415 = vector.broadcast %414 : vector<1x256xf32> to vector<8x256xf32>
    %416 = arith.mulf %413, %415 : vector<8x256xf32>
    %417 = vector.broadcast %412 : vector<8x1xf32> to vector<8x256xf32>
    %418 = arith.mulf %417, %416 : vector<8x256xf32>
    %419 = arith.addf %411, %418 : vector<8x256xf32>
    %420 = vector.extract_strided_slice %368 {offsets = [0, 7], sizes = [8, 1], strides = [1, 1]} : vector<8x11xf32> to vector<8x1xf32>
    %c224_i32_34 = arith.constant 224 : i32
    %421 = tpu.dynamic_rotate %367 by %c224_i32_34 dim 1 : vector<8x256xf32>, i32 -> vector<8x256xf32>
    %422 = vector.extract_strided_slice %1 {offsets = [7, 0], sizes = [1, 256], strides = [1, 1]} : vector<22x256xf32> to vector<1x256xf32>
    %423 = vector.broadcast %422 : vector<1x256xf32> to vector<8x256xf32>
    %424 = arith.mulf %421, %423 : vector<8x256xf32>
    %425 = vector.broadcast %420 : vector<8x1xf32> to vector<8x256xf32>
    %426 = arith.mulf %425, %424 : vector<8x256xf32>
    %427 = arith.addf %419, %426 : vector<8x256xf32>
    %428 = vector.extract_strided_slice %368 {offsets = [0, 8], sizes = [8, 1], strides = [1, 1]} : vector<8x11xf32> to vector<8x1xf32>
    %c208_i32_35 = arith.constant 208 : i32
    %429 = tpu.dynamic_rotate %367 by %c208_i32_35 dim 1 : vector<8x256xf32>, i32 -> vector<8x256xf32>
    %430 = vector.extract_strided_slice %1 {offsets = [8, 0], sizes = [1, 256], strides = [1, 1]} : vector<22x256xf32> to vector<1x256xf32>
    %431 = vector.broadcast %430 : vector<1x256xf32> to vector<8x256xf32>
    %432 = arith.mulf %429, %431 : vector<8x256xf32>
    %433 = vector.broadcast %428 : vector<8x1xf32> to vector<8x256xf32>
    %434 = arith.mulf %433, %432 : vector<8x256xf32>
    %435 = arith.addf %427, %434 : vector<8x256xf32>
    %436 = vector.extract_strided_slice %368 {offsets = [0, 9], sizes = [8, 1], strides = [1, 1]} : vector<8x11xf32> to vector<8x1xf32>
    %c192_i32 = arith.constant 192 : i32
    %437 = tpu.dynamic_rotate %367 by %c192_i32 dim 1 : vector<8x256xf32>, i32 -> vector<8x256xf32>
    %438 = vector.extract_strided_slice %1 {offsets = [9, 0], sizes = [1, 256], strides = [1, 1]} : vector<22x256xf32> to vector<1x256xf32>
    %439 = vector.broadcast %438 : vector<1x256xf32> to vector<8x256xf32>
    %440 = arith.mulf %437, %439 : vector<8x256xf32>
    %441 = vector.broadcast %436 : vector<8x1xf32> to vector<8x256xf32>
    %442 = arith.mulf %441, %440 : vector<8x256xf32>
    %443 = arith.addf %435, %442 : vector<8x256xf32>
    %444 = vector.extract_strided_slice %368 {offsets = [0, 10], sizes = [8, 1], strides = [1, 1]} : vector<8x11xf32> to vector<8x1xf32>
    %c176_i32 = arith.constant 176 : i32
    %445 = tpu.dynamic_rotate %367 by %c176_i32 dim 1 : vector<8x256xf32>, i32 -> vector<8x256xf32>
    %446 = vector.extract_strided_slice %1 {offsets = [10, 0], sizes = [1, 256], strides = [1, 1]} : vector<22x256xf32> to vector<1x256xf32>
    %447 = vector.broadcast %446 : vector<1x256xf32> to vector<8x256xf32>
    %448 = arith.mulf %445, %447 : vector<8x256xf32>
    %449 = vector.broadcast %444 : vector<8x1xf32> to vector<8x256xf32>
    %450 = arith.mulf %449, %448 : vector<8x256xf32>
    %451 = arith.addf %443, %450 : vector<8x256xf32>
    %452 = vector.extract_strided_slice %280 {offsets = [0, 23], sizes = [8, 1], strides = [1, 1]} : vector<8x24xf32> to vector<8x1xf32>
    %453 = vector.broadcast %452 : vector<8x1xf32> to vector<8x256xf32>
    %454 = arith.addf %451, %453 : vector<8x256xf32>
    %c0_36 = arith.constant 0 : index
    %c0_37 = arith.constant 0 : index
    %455 = vector.load %arg7[%c0_36, %c0_37] : memref<2x4xf32, #tpu.memory_space<vmem>>, vector<2x4xf32>
    %c0_38 = arith.constant 0 : index
    %c0_39 = arith.constant 0 : index
    %456 = vector.load %arg8[%c0_38, %c0_39] : memref<4x4xf32, #tpu.memory_space<vmem>>, vector<4x4xf32>
    %c0_40 = arith.constant 0 : index
    %c0_41 = arith.constant 0 : index
    %457 = vector.load %arg9[%c0_40, %c0_41] : memref<4x25xf32, #tpu.memory_space<vmem>>, vector<4x25xf32>
    %458 = vector.extract_strided_slice %454 {offsets = [0, 0], sizes = [4, 256], strides = [1, 1]} : vector<8x256xf32> to vector<4x256xf32>
    %459 = vector.extract_strided_slice %455 {offsets = [0, 0], sizes = [2, 1], strides = [1, 1]} : vector<2x4xf32> to vector<2x1xf32>
    %460 = vector.extract_strided_slice %458 {offsets = [0, 0], sizes = [1, 256], strides = [1, 1]} : vector<4x256xf32> to vector<1x256xf32>
    %461 = vector.broadcast %459 : vector<2x1xf32> to vector<2x256xf32>
    %462 = vector.broadcast %460 : vector<1x256xf32> to vector<2x256xf32>
    %463 = arith.mulf %461, %462 : vector<2x256xf32>
    %464 = vector.extract_strided_slice %455 {offsets = [0, 1], sizes = [2, 1], strides = [1, 1]} : vector<2x4xf32> to vector<2x1xf32>
    %465 = vector.extract_strided_slice %458 {offsets = [1, 0], sizes = [1, 256], strides = [1, 1]} : vector<4x256xf32> to vector<1x256xf32>
    %466 = vector.broadcast %464 : vector<2x1xf32> to vector<2x256xf32>
    %467 = vector.broadcast %465 : vector<1x256xf32> to vector<2x256xf32>
    %468 = arith.mulf %466, %467 : vector<2x256xf32>
    %469 = arith.addf %463, %468 : vector<2x256xf32>
    %470 = vector.extract_strided_slice %455 {offsets = [0, 2], sizes = [2, 1], strides = [1, 1]} : vector<2x4xf32> to vector<2x1xf32>
    %471 = vector.extract_strided_slice %458 {offsets = [2, 0], sizes = [1, 256], strides = [1, 1]} : vector<4x256xf32> to vector<1x256xf32>
    %472 = vector.broadcast %470 : vector<2x1xf32> to vector<2x256xf32>
    %473 = vector.broadcast %471 : vector<1x256xf32> to vector<2x256xf32>
    %474 = arith.mulf %472, %473 : vector<2x256xf32>
    %475 = arith.addf %469, %474 : vector<2x256xf32>
    %476 = vector.extract_strided_slice %455 {offsets = [0, 3], sizes = [2, 1], strides = [1, 1]} : vector<2x4xf32> to vector<2x1xf32>
    %477 = vector.extract_strided_slice %458 {offsets = [3, 0], sizes = [1, 256], strides = [1, 1]} : vector<4x256xf32> to vector<1x256xf32>
    %478 = vector.broadcast %476 : vector<2x1xf32> to vector<2x256xf32>
    %479 = vector.broadcast %477 : vector<1x256xf32> to vector<2x256xf32>
    %480 = arith.mulf %478, %479 : vector<2x256xf32>
    %481 = arith.addf %475, %480 : vector<2x256xf32>
    %482 = vector.extract_strided_slice %454 {offsets = [4, 0], sizes = [4, 256], strides = [1, 1]} : vector<8x256xf32> to vector<4x256xf32>
    %483 = vector.extract_strided_slice %455 {offsets = [0, 0], sizes = [2, 1], strides = [1, 1]} : vector<2x4xf32> to vector<2x1xf32>
    %484 = vector.extract_strided_slice %482 {offsets = [0, 0], sizes = [1, 256], strides = [1, 1]} : vector<4x256xf32> to vector<1x256xf32>
    %485 = vector.broadcast %483 : vector<2x1xf32> to vector<2x256xf32>
    %486 = vector.broadcast %484 : vector<1x256xf32> to vector<2x256xf32>
    %487 = arith.mulf %485, %486 : vector<2x256xf32>
    %488 = vector.extract_strided_slice %455 {offsets = [0, 1], sizes = [2, 1], strides = [1, 1]} : vector<2x4xf32> to vector<2x1xf32>
    %489 = vector.extract_strided_slice %482 {offsets = [1, 0], sizes = [1, 256], strides = [1, 1]} : vector<4x256xf32> to vector<1x256xf32>
    %490 = vector.broadcast %488 : vector<2x1xf32> to vector<2x256xf32>
    %491 = vector.broadcast %489 : vector<1x256xf32> to vector<2x256xf32>
    %492 = arith.mulf %490, %491 : vector<2x256xf32>
    %493 = arith.addf %487, %492 : vector<2x256xf32>
    %494 = vector.extract_strided_slice %455 {offsets = [0, 2], sizes = [2, 1], strides = [1, 1]} : vector<2x4xf32> to vector<2x1xf32>
    %495 = vector.extract_strided_slice %482 {offsets = [2, 0], sizes = [1, 256], strides = [1, 1]} : vector<4x256xf32> to vector<1x256xf32>
    %496 = vector.broadcast %494 : vector<2x1xf32> to vector<2x256xf32>
    %497 = vector.broadcast %495 : vector<1x256xf32> to vector<2x256xf32>
    %498 = arith.mulf %496, %497 : vector<2x256xf32>
    %499 = arith.addf %493, %498 : vector<2x256xf32>
    %500 = vector.extract_strided_slice %455 {offsets = [0, 3], sizes = [2, 1], strides = [1, 1]} : vector<2x4xf32> to vector<2x1xf32>
    %501 = vector.extract_strided_slice %482 {offsets = [3, 0], sizes = [1, 256], strides = [1, 1]} : vector<4x256xf32> to vector<1x256xf32>
    %502 = vector.broadcast %500 : vector<2x1xf32> to vector<2x256xf32>
    %503 = vector.broadcast %501 : vector<1x256xf32> to vector<2x256xf32>
    %504 = arith.mulf %502, %503 : vector<2x256xf32>
    %505 = arith.addf %499, %504 : vector<2x256xf32>
    %506 = tpu.concatenate %481, %505 in 0 : vector<2x256xf32>, vector<2x256xf32> -> vector<4x256xf32>
    %507 = vector.extract_strided_slice %456 {offsets = [0, 0], sizes = [4, 1], strides = [1, 1]} : vector<4x4xf32> to vector<4x1xf32>
    %508 = vector.broadcast %507 : vector<4x1xf32> to vector<4x256xf32>
    %509 = arith.mulf %506, %508 : vector<4x256xf32>
    %510 = vector.extract_strided_slice %456 {offsets = [0, 1], sizes = [4, 1], strides = [1, 1]} : vector<4x4xf32> to vector<4x1xf32>
    %511 = vector.broadcast %510 : vector<4x1xf32> to vector<4x256xf32>
    %512 = arith.addf %509, %511 : vector<4x256xf32>
    %cst_42 = arith.constant 0.000000e+00 : f32
    %513 = vector.broadcast %cst_42 : f32 to vector<4x256xf32>
    %514 = arith.subf %513, %512 : vector<4x256xf32>
    %515 = math.exp %514 : vector<4x256xf32>
    %cst_43 = arith.constant 1.000000e+00 : f32
    %516 = vector.broadcast %cst_43 : f32 to vector<4x256xf32>
    %517 = arith.addf %516, %515 : vector<4x256xf32>
    %518 = tpu.reciprocal %517 {approx = true} : vector<4x256xf32> -> vector<4x256xf32>
    %519 = arith.mulf %512, %518 : vector<4x256xf32>
    %c2_i32_44 = arith.constant 2 : i32
    %520 = tpu.dynamic_rotate %519 by %c2_i32_44 dim 1 : vector<4x256xf32>, i32 -> vector<4x256xf32>
    %521 = vector.extract_strided_slice %1 {offsets = [14, 0], sizes = [1, 256], strides = [1, 1]} : vector<22x256xf32> to vector<1x256xf32>
    %522 = vector.broadcast %521 : vector<1x256xf32> to vector<4x256xf32>
    %523 = arith.mulf %520, %522 : vector<4x256xf32>
    %c1_i32_45 = arith.constant 1 : i32
    %524 = tpu.dynamic_rotate %519 by %c1_i32_45 dim 1 : vector<4x256xf32>, i32 -> vector<4x256xf32>
    %525 = vector.extract_strided_slice %1 {offsets = [15, 0], sizes = [1, 256], strides = [1, 1]} : vector<22x256xf32> to vector<1x256xf32>
    %526 = vector.broadcast %525 : vector<1x256xf32> to vector<4x256xf32>
    %527 = arith.mulf %524, %526 : vector<4x256xf32>
    %c255_i32_46 = arith.constant 255 : i32
    %528 = tpu.dynamic_rotate %519 by %c255_i32_46 dim 1 : vector<4x256xf32>, i32 -> vector<4x256xf32>
    %529 = vector.extract_strided_slice %1 {offsets = [17, 0], sizes = [1, 256], strides = [1, 1]} : vector<22x256xf32> to vector<1x256xf32>
    %530 = vector.broadcast %529 : vector<1x256xf32> to vector<4x256xf32>
    %531 = arith.mulf %528, %530 : vector<4x256xf32>
    %c254_i32_47 = arith.constant 254 : i32
    %532 = tpu.dynamic_rotate %519 by %c254_i32_47 dim 1 : vector<4x256xf32>, i32 -> vector<4x256xf32>
    %533 = vector.extract_strided_slice %1 {offsets = [18, 0], sizes = [1, 256], strides = [1, 1]} : vector<22x256xf32> to vector<1x256xf32>
    %534 = vector.broadcast %533 : vector<1x256xf32> to vector<4x256xf32>
    %535 = arith.mulf %532, %534 : vector<4x256xf32>
    %536 = vector.extract_strided_slice %457 {offsets = [0, 0], sizes = [4, 1], strides = [1, 1]} : vector<4x25xf32> to vector<4x1xf32>
    %537 = vector.broadcast %536 : vector<4x1xf32> to vector<4x256xf32>
    %538 = arith.mulf %537, %523 : vector<4x256xf32>
    %539 = vector.extract_strided_slice %457 {offsets = [0, 1], sizes = [4, 1], strides = [1, 1]} : vector<4x25xf32> to vector<4x1xf32>
    %540 = vector.broadcast %539 : vector<4x1xf32> to vector<4x256xf32>
    %541 = arith.mulf %540, %527 : vector<4x256xf32>
    %542 = arith.addf %538, %541 : vector<4x256xf32>
    %543 = vector.extract_strided_slice %457 {offsets = [0, 2], sizes = [4, 1], strides = [1, 1]} : vector<4x25xf32> to vector<4x1xf32>
    %544 = vector.broadcast %543 : vector<4x1xf32> to vector<4x256xf32>
    %545 = arith.mulf %544, %519 : vector<4x256xf32>
    %546 = arith.addf %542, %545 : vector<4x256xf32>
    %547 = vector.extract_strided_slice %457 {offsets = [0, 3], sizes = [4, 1], strides = [1, 1]} : vector<4x25xf32> to vector<4x1xf32>
    %548 = vector.broadcast %547 : vector<4x1xf32> to vector<4x256xf32>
    %549 = arith.mulf %548, %531 : vector<4x256xf32>
    %550 = arith.addf %546, %549 : vector<4x256xf32>
    %551 = vector.extract_strided_slice %457 {offsets = [0, 4], sizes = [4, 1], strides = [1, 1]} : vector<4x25xf32> to vector<4x1xf32>
    %552 = vector.broadcast %551 : vector<4x1xf32> to vector<4x256xf32>
    %553 = arith.mulf %552, %535 : vector<4x256xf32>
    %554 = arith.addf %550, %553 : vector<4x256xf32>
    %c32_i32_48 = arith.constant 32 : i32
    %555 = tpu.dynamic_rotate %554 by %c32_i32_48 dim 1 : vector<4x256xf32>, i32 -> vector<4x256xf32>
    %556 = vector.extract_strided_slice %1 {offsets = [3, 0], sizes = [1, 256], strides = [1, 1]} : vector<22x256xf32> to vector<1x256xf32>
    %557 = vector.broadcast %556 : vector<1x256xf32> to vector<4x256xf32>
    %558 = arith.mulf %555, %557 : vector<4x256xf32>
    %559 = vector.extract_strided_slice %457 {offsets = [0, 5], sizes = [4, 1], strides = [1, 1]} : vector<4x25xf32> to vector<4x1xf32>
    %560 = vector.broadcast %559 : vector<4x1xf32> to vector<4x256xf32>
    %561 = arith.mulf %560, %523 : vector<4x256xf32>
    %562 = vector.extract_strided_slice %457 {offsets = [0, 6], sizes = [4, 1], strides = [1, 1]} : vector<4x25xf32> to vector<4x1xf32>
    %563 = vector.broadcast %562 : vector<4x1xf32> to vector<4x256xf32>
    %564 = arith.mulf %563, %527 : vector<4x256xf32>
    %565 = arith.addf %561, %564 : vector<4x256xf32>
    %566 = vector.extract_strided_slice %457 {offsets = [0, 7], sizes = [4, 1], strides = [1, 1]} : vector<4x25xf32> to vector<4x1xf32>
    %567 = vector.broadcast %566 : vector<4x1xf32> to vector<4x256xf32>
    %568 = arith.mulf %567, %519 : vector<4x256xf32>
    %569 = arith.addf %565, %568 : vector<4x256xf32>
    %570 = vector.extract_strided_slice %457 {offsets = [0, 8], sizes = [4, 1], strides = [1, 1]} : vector<4x25xf32> to vector<4x1xf32>
    %571 = vector.broadcast %570 : vector<4x1xf32> to vector<4x256xf32>
    %572 = arith.mulf %571, %531 : vector<4x256xf32>
    %573 = arith.addf %569, %572 : vector<4x256xf32>
    %574 = vector.extract_strided_slice %457 {offsets = [0, 9], sizes = [4, 1], strides = [1, 1]} : vector<4x25xf32> to vector<4x1xf32>
    %575 = vector.broadcast %574 : vector<4x1xf32> to vector<4x256xf32>
    %576 = arith.mulf %575, %535 : vector<4x256xf32>
    %577 = arith.addf %573, %576 : vector<4x256xf32>
    %c16_i32_49 = arith.constant 16 : i32
    %578 = tpu.dynamic_rotate %577 by %c16_i32_49 dim 1 : vector<4x256xf32>, i32 -> vector<4x256xf32>
    %579 = vector.extract_strided_slice %1 {offsets = [4, 0], sizes = [1, 256], strides = [1, 1]} : vector<22x256xf32> to vector<1x256xf32>
    %580 = vector.broadcast %579 : vector<1x256xf32> to vector<4x256xf32>
    %581 = arith.mulf %578, %580 : vector<4x256xf32>
    %582 = arith.addf %558, %581 : vector<4x256xf32>
    %583 = vector.extract_strided_slice %457 {offsets = [0, 10], sizes = [4, 1], strides = [1, 1]} : vector<4x25xf32> to vector<4x1xf32>
    %584 = vector.broadcast %583 : vector<4x1xf32> to vector<4x256xf32>
    %585 = arith.mulf %584, %523 : vector<4x256xf32>
    %586 = vector.extract_strided_slice %457 {offsets = [0, 11], sizes = [4, 1], strides = [1, 1]} : vector<4x25xf32> to vector<4x1xf32>
    %587 = vector.broadcast %586 : vector<4x1xf32> to vector<4x256xf32>
    %588 = arith.mulf %587, %527 : vector<4x256xf32>
    %589 = arith.addf %585, %588 : vector<4x256xf32>
    %590 = vector.extract_strided_slice %457 {offsets = [0, 12], sizes = [4, 1], strides = [1, 1]} : vector<4x25xf32> to vector<4x1xf32>
    %591 = vector.broadcast %590 : vector<4x1xf32> to vector<4x256xf32>
    %592 = arith.mulf %591, %519 : vector<4x256xf32>
    %593 = arith.addf %589, %592 : vector<4x256xf32>
    %594 = vector.extract_strided_slice %457 {offsets = [0, 13], sizes = [4, 1], strides = [1, 1]} : vector<4x25xf32> to vector<4x1xf32>
    %595 = vector.broadcast %594 : vector<4x1xf32> to vector<4x256xf32>
    %596 = arith.mulf %595, %531 : vector<4x256xf32>
    %597 = arith.addf %593, %596 : vector<4x256xf32>
    %598 = vector.extract_strided_slice %457 {offsets = [0, 14], sizes = [4, 1], strides = [1, 1]} : vector<4x25xf32> to vector<4x1xf32>
    %599 = vector.broadcast %598 : vector<4x1xf32> to vector<4x256xf32>
    %600 = arith.mulf %599, %535 : vector<4x256xf32>
    %601 = arith.addf %597, %600 : vector<4x256xf32>
    %602 = arith.addf %582, %601 : vector<4x256xf32>
    %603 = vector.extract_strided_slice %457 {offsets = [0, 15], sizes = [4, 1], strides = [1, 1]} : vector<4x25xf32> to vector<4x1xf32>
    %604 = vector.broadcast %603 : vector<4x1xf32> to vector<4x256xf32>
    %605 = arith.mulf %604, %523 : vector<4x256xf32>
    %606 = vector.extract_strided_slice %457 {offsets = [0, 16], sizes = [4, 1], strides = [1, 1]} : vector<4x25xf32> to vector<4x1xf32>
    %607 = vector.broadcast %606 : vector<4x1xf32> to vector<4x256xf32>
    %608 = arith.mulf %607, %527 : vector<4x256xf32>
    %609 = arith.addf %605, %608 : vector<4x256xf32>
    %610 = vector.extract_strided_slice %457 {offsets = [0, 17], sizes = [4, 1], strides = [1, 1]} : vector<4x25xf32> to vector<4x1xf32>
    %611 = vector.broadcast %610 : vector<4x1xf32> to vector<4x256xf32>
    %612 = arith.mulf %611, %519 : vector<4x256xf32>
    %613 = arith.addf %609, %612 : vector<4x256xf32>
    %614 = vector.extract_strided_slice %457 {offsets = [0, 18], sizes = [4, 1], strides = [1, 1]} : vector<4x25xf32> to vector<4x1xf32>
    %615 = vector.broadcast %614 : vector<4x1xf32> to vector<4x256xf32>
    %616 = arith.mulf %615, %531 : vector<4x256xf32>
    %617 = arith.addf %613, %616 : vector<4x256xf32>
    %618 = vector.extract_strided_slice %457 {offsets = [0, 19], sizes = [4, 1], strides = [1, 1]} : vector<4x25xf32> to vector<4x1xf32>
    %619 = vector.broadcast %618 : vector<4x1xf32> to vector<4x256xf32>
    %620 = arith.mulf %619, %535 : vector<4x256xf32>
    %621 = arith.addf %617, %620 : vector<4x256xf32>
    %c240_i32_50 = arith.constant 240 : i32
    %622 = tpu.dynamic_rotate %621 by %c240_i32_50 dim 1 : vector<4x256xf32>, i32 -> vector<4x256xf32>
    %623 = vector.extract_strided_slice %1 {offsets = [6, 0], sizes = [1, 256], strides = [1, 1]} : vector<22x256xf32> to vector<1x256xf32>
    %624 = vector.broadcast %623 : vector<1x256xf32> to vector<4x256xf32>
    %625 = arith.mulf %622, %624 : vector<4x256xf32>
    %626 = arith.addf %602, %625 : vector<4x256xf32>
    %627 = vector.extract_strided_slice %457 {offsets = [0, 20], sizes = [4, 1], strides = [1, 1]} : vector<4x25xf32> to vector<4x1xf32>
    %628 = vector.broadcast %627 : vector<4x1xf32> to vector<4x256xf32>
    %629 = arith.mulf %628, %523 : vector<4x256xf32>
    %630 = vector.extract_strided_slice %457 {offsets = [0, 21], sizes = [4, 1], strides = [1, 1]} : vector<4x25xf32> to vector<4x1xf32>
    %631 = vector.broadcast %630 : vector<4x1xf32> to vector<4x256xf32>
    %632 = arith.mulf %631, %527 : vector<4x256xf32>
    %633 = arith.addf %629, %632 : vector<4x256xf32>
    %634 = vector.extract_strided_slice %457 {offsets = [0, 22], sizes = [4, 1], strides = [1, 1]} : vector<4x25xf32> to vector<4x1xf32>
    %635 = vector.broadcast %634 : vector<4x1xf32> to vector<4x256xf32>
    %636 = arith.mulf %635, %519 : vector<4x256xf32>
    %637 = arith.addf %633, %636 : vector<4x256xf32>
    %638 = vector.extract_strided_slice %457 {offsets = [0, 23], sizes = [4, 1], strides = [1, 1]} : vector<4x25xf32> to vector<4x1xf32>
    %639 = vector.broadcast %638 : vector<4x1xf32> to vector<4x256xf32>
    %640 = arith.mulf %639, %531 : vector<4x256xf32>
    %641 = arith.addf %637, %640 : vector<4x256xf32>
    %642 = vector.extract_strided_slice %457 {offsets = [0, 24], sizes = [4, 1], strides = [1, 1]} : vector<4x25xf32> to vector<4x1xf32>
    %643 = vector.broadcast %642 : vector<4x1xf32> to vector<4x256xf32>
    %644 = arith.mulf %643, %535 : vector<4x256xf32>
    %645 = arith.addf %641, %644 : vector<4x256xf32>
    %c224_i32_51 = arith.constant 224 : i32
    %646 = tpu.dynamic_rotate %645 by %c224_i32_51 dim 1 : vector<4x256xf32>, i32 -> vector<4x256xf32>
    %647 = vector.extract_strided_slice %1 {offsets = [7, 0], sizes = [1, 256], strides = [1, 1]} : vector<22x256xf32> to vector<1x256xf32>
    %648 = vector.broadcast %647 : vector<1x256xf32> to vector<4x256xf32>
    %649 = arith.mulf %646, %648 : vector<4x256xf32>
    %650 = arith.addf %626, %649 : vector<4x256xf32>
    %651 = vector.extract_strided_slice %456 {offsets = [0, 2], sizes = [4, 1], strides = [1, 1]} : vector<4x4xf32> to vector<4x1xf32>
    %652 = vector.broadcast %651 : vector<4x1xf32> to vector<4x256xf32>
    %653 = arith.mulf %650, %652 : vector<4x256xf32>
    %654 = vector.extract_strided_slice %456 {offsets = [0, 3], sizes = [4, 1], strides = [1, 1]} : vector<4x4xf32> to vector<4x1xf32>
    %655 = vector.broadcast %654 : vector<4x1xf32> to vector<4x256xf32>
    %656 = arith.addf %653, %655 : vector<4x256xf32>
    %cst_52 = arith.constant 0.000000e+00 : f32
    %657 = vector.broadcast %cst_52 : f32 to vector<4x256xf32>
    %658 = arith.subf %657, %656 : vector<4x256xf32>
    %659 = math.exp %658 : vector<4x256xf32>
    %cst_53 = arith.constant 1.000000e+00 : f32
    %660 = vector.broadcast %cst_53 : f32 to vector<4x256xf32>
    %661 = arith.addf %660, %659 : vector<4x256xf32>
    %662 = tpu.reciprocal %661 {approx = true} : vector<4x256xf32> -> vector<4x256xf32>
    %663 = arith.mulf %656, %662 : vector<4x256xf32>
    %664 = vector.extract_strided_slice %519 {offsets = [0, 0], sizes = [2, 256], strides = [1, 1]} : vector<4x256xf32> to vector<2x256xf32>
    %665 = vector.extract_strided_slice %663 {offsets = [0, 0], sizes = [2, 256], strides = [1, 1]} : vector<4x256xf32> to vector<2x256xf32>
    %666 = vector.extract_strided_slice %664 {offsets = [0, 0], sizes = [1, 256], strides = [1, 1]} : vector<2x256xf32> to vector<1x256xf32>
    %667 = vector.extract_strided_slice %665 {offsets = [0, 0], sizes = [1, 256], strides = [1, 1]} : vector<2x256xf32> to vector<1x256xf32>
    %668 = vector.extract_strided_slice %664 {offsets = [1, 0], sizes = [1, 256], strides = [1, 1]} : vector<2x256xf32> to vector<1x256xf32>
    %669 = vector.extract_strided_slice %665 {offsets = [1, 0], sizes = [1, 256], strides = [1, 1]} : vector<2x256xf32> to vector<1x256xf32>
    %670 = vector.extract_strided_slice %519 {offsets = [2, 0], sizes = [2, 256], strides = [1, 1]} : vector<4x256xf32> to vector<2x256xf32>
    %671 = vector.extract_strided_slice %663 {offsets = [2, 0], sizes = [2, 256], strides = [1, 1]} : vector<4x256xf32> to vector<2x256xf32>
    %672 = vector.extract_strided_slice %670 {offsets = [0, 0], sizes = [1, 256], strides = [1, 1]} : vector<2x256xf32> to vector<1x256xf32>
    %673 = vector.extract_strided_slice %671 {offsets = [0, 0], sizes = [1, 256], strides = [1, 1]} : vector<2x256xf32> to vector<1x256xf32>
    %674 = vector.extract_strided_slice %670 {offsets = [1, 0], sizes = [1, 256], strides = [1, 1]} : vector<2x256xf32> to vector<1x256xf32>
    %675 = vector.extract_strided_slice %671 {offsets = [1, 0], sizes = [1, 256], strides = [1, 1]} : vector<2x256xf32> to vector<1x256xf32>
    %676 = tpu.concatenate %666, %667, %668, %669, %672, %673, %674, %675 in 0 : vector<1x256xf32>, vector<1x256xf32>, vector<1x256xf32>, vector<1x256xf32>, vector<1x256xf32>, vector<1x256xf32>, vector<1x256xf32>, vector<1x256xf32> -> vector<8x256xf32>
    %cst_54 = arith.constant 0.000000e+00 : f32
    %677 = vector.broadcast %cst_54 : f32 to vector<8x256xf32>
    %678 = arith.subf %677, %676 : vector<8x256xf32>
    %679 = math.exp %678 : vector<8x256xf32>
    %cst_55 = arith.constant 1.000000e+00 : f32
    %680 = vector.broadcast %cst_55 : f32 to vector<8x256xf32>
    %681 = arith.addf %680, %679 : vector<8x256xf32>
    %cst_56 = arith.constant 1.000000e+00 : f32
    %682 = vector.broadcast %cst_56 : f32 to vector<8x256xf32>
    %683 = arith.divf %682, %681 : vector<8x256xf32>
    %684 = arith.mulf %683, %0 : vector<8x256xf32>
    %c0_57 = arith.constant 0 : index
    %c0_58 = arith.constant 0 : index
    %685 = vector.load %arg10[%c0_57, %c0_58] : memref<8x256xf32, #tpu.memory_space<vmem>>, vector<8x256xf32>
    tpu.vector_store %arg10[%c0_57, %c0_58], %684 {strides = array<i32>} : memref<8x256xf32, #tpu.memory_space<vmem>>, vector<8x256xf32>,
    return
  }
  func.func @transform_0(%arg0: i32) -> (i32, i32) {
    %c0_i32 = arith.constant 0 : i32
    %c0_i32_0 = arith.constant 0 : i32
    return %arg0, %c0_i32 : i32, i32
  }
  func.func @transform_1(%arg0: i32) -> (i32, i32) {
    %c0_i32 = arith.constant 0 : i32
    %c0_i32_0 = arith.constant 0 : i32
    %c0_i32_1 = arith.constant 0 : i32
    return %c0_i32, %c0_i32_0 : i32, i32
  }
  func.func @transform_2(%arg0: i32) -> (i32, i32) {
    %c0_i32 = arith.constant 0 : i32
    %c0_i32_0 = arith.constant 0 : i32
    %c0_i32_1 = arith.constant 0 : i32
    return %c0_i32, %c0_i32_0 : i32, i32
  }
  func.func @transform_3(%arg0: i32) -> (i32, i32) {
    %c0_i32 = arith.constant 0 : i32
    %c0_i32_0 = arith.constant 0 : i32
    %c0_i32_1 = arith.constant 0 : i32
    return %c0_i32, %c0_i32_0 : i32, i32
  }
  func.func @transform_4(%arg0: i32) -> (i32, i32) {
    %c0_i32 = arith.constant 0 : i32
    %c0_i32_0 = arith.constant 0 : i32
    %c0_i32_1 = arith.constant 0 : i32
    return %c0_i32, %c0_i32_0 : i32, i32
  }
  func.func @transform_5(%arg0: i32) -> (i32, i32) {
    %c0_i32 = arith.constant 0 : i32
    %c0_i32_0 = arith.constant 0 : i32
    %c0_i32_1 = arith.constant 0 : i32
    return %c0_i32, %c0_i32_0 : i32, i32
  }
  func.func @transform_6(%arg0: i32) -> (i32, i32) {
    %c0_i32 = arith.constant 0 : i32
    %c0_i32_0 = arith.constant 0 : i32
    %c0_i32_1 = arith.constant 0 : i32
    return %c0_i32, %c0_i32_0 : i32, i32
  }
  func.func @transform_7(%arg0: i32) -> (i32, i32) {
    %c0_i32 = arith.constant 0 : i32
    %c0_i32_0 = arith.constant 0 : i32
    %c0_i32_1 = arith.constant 0 : i32
    return %c0_i32, %c0_i32_0 : i32, i32
  }
  func.func @transform_8(%arg0: i32) -> (i32, i32) {
    %c0_i32 = arith.constant 0 : i32
    %c0_i32_0 = arith.constant 0 : i32
    %c0_i32_1 = arith.constant 0 : i32
    return %c0_i32, %c0_i32_0 : i32, i32
  }
  func.func @transform_9(%arg0: i32) -> (i32, i32) {
    %c0_i32 = arith.constant 0 : i32
    %c0_i32_0 = arith.constant 0 : i32
    return %arg0, %c0_i32 : i32, i32
  }
}

</mosaic_0001>

<llo_original>
// kernel: lfca_forward.1
$region0: #{lfca_forward.1}
  #allocation0 [shape = 'u32[]', space=smem, size = 0x4, offset = 0x4, fixed_abs, tag = 'smem constant byte address 0x4 - core index']
  #allocation1 [shape = 'u32[144,128]{1,0:T(1,128)}', space=vmem, size = 0x12000, scoped, tag = 'internal scratch']
  %s0 = inlined_call_operand.vmem [shape: f32[8,256], index: 0, kind: input, shape index: {}]
  %s1 = inlined_call_operand.vmem [shape: f32[22,256], index: 1, kind: input, shape index: {}]
  %s2 = inlined_call_operand.vmem [shape: f32[2,4], index: 2, kind: input, shape index: {}]
  %s3 = inlined_call_operand.vmem [shape: f32[4,4], index: 3, kind: input, shape index: {}]
  %s4 = inlined_call_operand.vmem [shape: f32[4,25], index: 4, kind: input, shape index: {}]
  %s5 = inlined_call_operand.vmem [shape: f32[8,24], index: 5, kind: input, shape index: {}]
  %s6 = inlined_call_operand.vmem [shape: f32[2,4], index: 6, kind: input, shape index: {}]
  %s7 = inlined_call_operand.vmem [shape: f32[4,4], index: 7, kind: input, shape index: {}]
  %s8 = inlined_call_operand.vmem [shape: f32[4,25], index: 8, kind: input, shape index: {}]
  %s9 = inlined_call_operand.vmem [shape: f32[8,256], index: 9, kind: output, shape index: {}]
  %s10 = sld [smem:[#allocation0]]
  $region46: #{lfca_forward.1} parent=0
    _
  %s12 = ssub.s32 1, %s10
  %s13 = scalar_select 0, %s12, %s10
  // Predicated region
  $region2: #{lfca_forward.1} parent=0 // pred_check
    _
  $region3: #{lfca_forward.1} parent=0 // pred_check_branch
    %15 = sbr.rel (0) target = $region5
  $region4: #{lfca_forward.1} parent=0 // pred_region
    _
  $region5: #{lfca_forward.1} parent=0 // pred_fallthru
    _
  // Predicated region
  $region6: #{lfca_forward.1} parent=0 // pred_check
    _
  $region7: #{lfca_forward.1} parent=0 // pred_check_branch
    %17 = sbr.rel (0) target = $region9
  $region8: #{lfca_forward.1} parent=0 // pred_region
    _
  $region9: #{lfca_forward.1} parent=0 // pred_fallthru
    _
  // Predicated region
  $region10: #{lfca_forward.1} parent=0 // pred_check
    _
  $region11: #{lfca_forward.1} parent=0 // pred_check_branch
    %19 = sbr.rel (0) target = $region13
  $region12: #{lfca_forward.1} parent=0 // pred_region
    _
  $region13: #{lfca_forward.1} parent=0 // pred_fallthru
    _
  // Predicated region
  $region14: #{lfca_forward.1} parent=0 // pred_check
    _
  $region15: #{lfca_forward.1} parent=0 // pred_check_branch
    %21 = sbr.rel (0) target = $region17
  $region16: #{lfca_forward.1} parent=0 // pred_region
    _
  $region17: #{lfca_forward.1} parent=0 // pred_fallthru
    _
  // Predicated region
  $region18: #{lfca_forward.1} parent=0 // pred_check
    _
  $region19: #{lfca_forward.1} parent=0 // pred_check_branch
    %23 = sbr.rel (0) target = $region21
  $region20: #{lfca_forward.1} parent=0 // pred_region
    _
  $region21: #{lfca_forward.1} parent=0 // pred_fallthru
    _
  // Predicated region
  $region22: #{lfca_forward.1} parent=0 // pred_check
    _
  $region23: #{lfca_forward.1} parent=0 // pred_check_branch
    %25 = sbr.rel (0) target = $region25
  $region24: #{lfca_forward.1} parent=0 // pred_region
    _
  $region25: #{lfca_forward.1} parent=0 // pred_fallthru
    _
  // Predicated region
  $region26: #{lfca_forward.1} parent=0 // pred_check
    _
  $region27: #{lfca_forward.1} parent=0 // pred_check_branch
    %27 = sbr.rel (0) target = $region29
  $region28: #{lfca_forward.1} parent=0 // pred_region
    _
  $region29: #{lfca_forward.1} parent=0 // pred_fallthru
    _
  // Predicated region
  $region30: #{lfca_forward.1} parent=0 // pred_check
    _
  $region31: #{lfca_forward.1} parent=0 // pred_check_branch
    %29 = sbr.rel (0) target = $region33
  $region32: #{lfca_forward.1} parent=0 // pred_region
    _
  $region33: #{lfca_forward.1} parent=0 // pred_fallthru
    _
  // Predicated region
  $region34: #{lfca_forward.1} parent=0 // pred_check
    _
  $region35: #{lfca_forward.1} parent=0 // pred_check_branch
    %31 = sbr.rel (0) target = $region37
  $region36: #{lfca_forward.1} parent=0 // pred_region
    _
  $region37: #{lfca_forward.1} parent=0 // pred_fallthru
    _
  %v32 = vld [vmem:[%s0] sm:$0xff]
  %v33 = vld [vmem:[%s0 + $0x8] sm:$0xff]
  %v34 = vld [vmem:[%s1] sm:$0xff]
  %v35 = vld [vmem:[%s1 + $0x8] sm:$0xff]
  %v36 = vld [vmem:[%s1 + $0x10] sm:$0xff]
  %v37 = vld [vmem:[%s1 + $0x18] sm:$0xff]
  %v38 = vld [vmem:[%s1 + $0x20] sm:$0x3f]
  %v39 = vld [vmem:[%s1 + $0x28] sm:$0x3f]
  %40 = vrot.lane.b32.xlu0 %v32, 3
  %v41 = vpop.permute.xlu0 %40
  %42 = vrot.lane.b32.xlu0 %v33, 3
  %v43 = vpop.permute.xlu0 %42
  %v44 = vlaneseq
  %v45 = vand.u32 %v44, 127
  %vm46 = vcmp.lt.s32.totalorder %v45, 3
  %v47 = vsel %vm46, %v41, %v43
  %v48 = vsel %vm46, %v43, %v41
  %v49 = vlaneseq
  %v50 = vshrl.u32 %v49, 7
  %v51 = vsub.s32 5, %v50
  %v52 = vrot.slane %v36, %v51
  %v53 = vlaneseq
  %v54 = vshrl.u32 %v53, 7
  %v55 = vsub.s32 5, %v54
  %v56 = vrot.slane %v37, %v55
  %v57 = vmul.f32 %v48, %v52
  %v58 = vmul.f32 %v47, %v56
  %59 = vrot.lane.b32.xlu0 %v32, 2
  %v60 = vpop.permute.xlu0 %59
  %61 = vrot.lane.b32.xlu0 %v33, 2
  %v62 = vpop.permute.xlu0 %61
  %vm63 = vcmp.lt.s32.totalorder %v45, 2
  %v64 = vsel %vm63, %v60, %v62
  %v65 = vsel %vm63, %v62, %v60
  %v66 = vlaneseq
  %v67 = vshrl.u32 %v66, 7
  %v68 = vsub.s32 6, %v67
  %v69 = vrot.slane %v36, %v68
  %v70 = vlaneseq
  %v71 = vshrl.u32 %v70, 7
  %v72 = vsub.s32 6, %v71
  %v73 = vrot.slane %v37, %v72
  %v74 = vmul.f32 %v65, %v69
  %v75 = vmul.f32 %v64, %v73
  %v76 = vadd.f32 %v57, %v74
  %v77 = vadd.f32 %v58, %v75
  %78 = vrot.lane.b32.xlu0 %v32, 1
  %v79 = vpop.permute.xlu0 %78
  %80 = vrot.lane.b32.xlu0 %v33, 1
  %v81 = vpop.permute.xlu0 %80
  %vm82 = vcmp.lt.s32.totalorder %v45, 1
  %v83 = vsel %vm82, %v79, %v81
  %v84 = vsel %vm82, %v81, %v79
  %v85 = vlaneseq
  %v86 = vshrl.u32 %v85, 7
  %v87 = vsub.s32 7, %v86
  %v88 = vrot.slane %v36, %v87
  %v89 = vlaneseq
  %v90 = vshrl.u32 %v89, 7
  %v91 = vsub.s32 7, %v90
  %v92 = vrot.slane %v37, %v91
  %v93 = vmul.f32 %v84, %v88
  %v94 = vmul.f32 %v83, %v92
  %v95 = vadd.f32 %v76, %v93
  %v96 = vadd.f32 %v77, %v94
  %v97 = vadd.f32 %v95, %v32
  %v98 = vadd.f32 %v96, %v33
  %99 = vrot.lane.b32.xlu0 %v32, 127
  %v100 = vpop.permute.xlu0 %99
  %101 = vrot.lane.b32.xlu0 %v33, 127
  %v102 = vpop.permute.xlu0 %101
  %vm103 = vcmp.lt.s32.totalorder %v45, 127
  %v104 = vsel %vm103, %v100, %v102
  %v105 = vsel %vm103, %v102, %v100
  %v106 = vlaneseq
  %v107 = vshrl.u32 %v106, 7
  %v108 = vsub.s32 1, %v107
  %v109 = vrot.slane %v38, %v108
  %v110 = vlaneseq
  %v111 = vshrl.u32 %v110, 7
  %v112 = vsub.s32 1, %v111
  %v113 = vrot.slane %v39, %v112
  %v114 = vmul.f32 %v104, %v109
  %v115 = vmul.f32 %v105, %v113
  %v116 = vadd.f32 %v97, %v114
  %v117 = vadd.f32 %v98, %v115
  %118 = vrot.lane.b32.xlu0 %v32, 126
  %v119 = vpop.permute.xlu0 %118
  %120 = vrot.lane.b32.xlu0 %v33, 126
  %v121 = vpop.permute.xlu0 %120
  %vm122 = vcmp.lt.s32.totalorder %v45, 126
  %v123 = vsel %vm122, %v119, %v121
  %v124 = vsel %vm122, %v121, %v119
  %v125 = vlaneseq
  %v126 = vshrl.u32 %v125, 7
  %v127 = vsub.s32 2, %v126
  %v128 = vrot.slane %v38, %v127
  %v129 = vlaneseq
  %v130 = vshrl.u32 %v129, 7
  %v131 = vsub.s32 2, %v130
  %v132 = vrot.slane %v39, %v131
  %v133 = vmul.f32 %v123, %v128
  %v134 = vmul.f32 %v124, %v132
  %v135 = vadd.f32 %v116, %v133
  %v136 = vadd.f32 %v117, %v134
  %137 = vrot.lane.b32.xlu0 %v32, 125
  %v138 = vpop.permute.xlu0 %137
  %139 = vrot.lane.b32.xlu0 %v33, 125
  %v140 = vpop.permute.xlu0 %139
  %vm141 = vcmp.lt.s32.totalorder %v45, 125
  %v142 = vsel %vm141, %v138, %v140
  %v143 = vsel %vm141, %v140, %v138
  %v144 = vlaneseq
  %v145 = vshrl.u32 %v144, 7
  %v146 = vsub.s32 3, %v145
  %v147 = vrot.slane %v38, %v146
  %v148 = vlaneseq
  %v149 = vshrl.u32 %v148, 7
  %v150 = vsub.s32 3, %v149
  %v151 = vrot.slane %v39, %v150
  %v152 = vmul.f32 %v142, %v147
  %v153 = vmul.f32 %v143, %v151
  %v154 = vadd.f32 %v135, %v152
  %v155 = vadd.f32 %v136, %v153
  %v156 = vmul.f32 %v154, 0.14285715
  %v157 = vmul.f32 %v155, 0.14285715
  %158 = vrot.lane.b32.xlu0 %v156, 48
  %v159 = vpop.permute.xlu0 %158
  %160 = vrot.lane.b32.xlu0 %v157, 48
  %v161 = vpop.permute.xlu0 %160
  %vm162 = vcmp.lt.s32.totalorder %v45, 48
  %v163 = vsel %vm162, %v159, %v161
  %v164 = vsel %vm162, %v161, %v159
  %v165 = vlaneseq
  %v166 = vshrl.u32 %v165, 7
  %v167 = vsub.s32 2, %v166
  %v168 = vrot.slane %v34, %v167
  %v169 = vlaneseq
  %v170 = vshrl.u32 %v169, 7
  %v171 = vsub.s32 2, %v170
  %v172 = vrot.slane %v35, %v171
  %v173 = vmul.f32 %v164, %v168
  %v174 = vmul.f32 %v163, %v172
  %175 = vrot.lane.b32.xlu0 %v156, 32
  %v176 = vpop.permute.xlu0 %175
  %177 = vrot.lane.b32.xlu0 %v157, 32
  %v178 = vpop.permute.xlu0 %177
  %vm179 = vcmp.lt.s32.totalorder %v45, 32
  %v180 = vsel %vm179, %v176, %v178
  %v181 = vsel %vm179, %v178, %v176
  %v182 = vlaneseq
  %v183 = vshrl.u32 %v182, 7
  %v184 = vsub.s32 3, %v183
  %v185 = vrot.slane %v34, %v184
  %v186 = vlaneseq
  %v187 = vshrl.u32 %v186, 7
  %v188 = vsub.s32 3, %v187
  %v189 = vrot.slane %v35, %v188
  %v190 = vmul.f32 %v181, %v185
  %v191 = vmul.f32 %v180, %v189
  %v192 = vadd.f32 %v173, %v190
  %v193 = vadd.f32 %v174, %v191
  %194 = vrot.lane.b32.xlu0 %v156, 16
  %v195 = vpop.permute.xlu0 %194
  %196 = vrot.lane.b32.xlu0 %v157, 16
  %v197 = vpop.permute.xlu0 %196
  %vm198 = vcmp.lt.s32.totalorder %v45, 16
  %v199 = vsel %vm198, %v195, %v197
  %v200 = vsel %vm198, %v197, %v195
  %v201 = vlaneseq
  %v202 = vshrl.u32 %v201, 7
  %v203 = vsub.s32 4, %v202
  %v204 = vrot.slane %v34, %v203
  %v205 = vlaneseq
  %v206 = vshrl.u32 %v205, 7
  %v207 = vsub.s32 4, %v206
  %v208 = vrot.slane %v35, %v207
  %v209 = vmul.f32 %v200, %v204
  %v210 = vmul.f32 %v199, %v208
  %v211 = vadd.f32 %v192, %v209
  %v212 = vadd.f32 %v193, %v210
  %v213 = vadd.f32 %v211, %v156
  %v214 = vadd.f32 %v212, %v157
  %215 = vrot.lane.b32.xlu0 %v156, 112
  %v216 = vpop.permute.xlu0 %215
  %217 = vrot.lane.b32.xlu0 %v157, 112
  %v218 = vpop.permute.xlu0 %217
  %vm219 = vcmp.lt.s32.totalorder %v45, 112
  %v220 = vsel %vm219, %v216, %v218
  %v221 = vsel %vm219, %v218, %v216
  %v222 = vlaneseq
  %v223 = vshrl.u32 %v222, 7
  %v224 = vsub.s32 6, %v223
  %v225 = vrot.slane %v34, %v224
  %v226 = vlaneseq
  %v227 = vshrl.u32 %v226, 7
  %v228 = vsub.s32 6, %v227
  %v229 = vrot.slane %v35, %v228
  %v230 = vmul.f32 %v220, %v225
  %v231 = vmul.f32 %v221, %v229
  %v232 = vadd.f32 %v213, %v230
  %v233 = vadd.f32 %v214, %v231
  %234 = vrot.lane.b32.xlu0 %v156, 96
  %v235 = vpop.permute.xlu0 %234
  %236 = vrot.lane.b32.xlu0 %v157, 96
  %v237 = vpop.permute.xlu0 %236
  %vm238 = vcmp.lt.s32.totalorder %v45, 96
  %v239 = vsel %vm238, %v235, %v237
  %v240 = vsel %vm238, %v237, %v235
  %v241 = vlaneseq
  %v242 = vshrl.u32 %v241, 7
  %v243 = vsub.s32 7, %v242
  %v244 = vrot.slane %v34, %v243
  %v245 = vlaneseq
  %v246 = vshrl.u32 %v245, 7
  %v247 = vsub.s32 7, %v246
  %v248 = vrot.slane %v35, %v247
  %v249 = vmul.f32 %v239, %v244
  %v250 = vmul.f32 %v240, %v248
  %v251 = vadd.f32 %v232, %v249
  %v252 = vadd.f32 %v233, %v250
  %253 = vrot.lane.b32.xlu0 %v156, 80
  %v254 = vpop.permute.xlu0 %253
  %255 = vrot.lane.b32.xlu0 %v157, 80
  %v256 = vpop.permute.xlu0 %255
  %vm257 = vcmp.lt.s32.totalorder %v45, 80
  %v258 = vsel %vm257, %v254, %v256
  %v259 = vsel %vm257, %v256, %v254
  %v260 = vlaneseq
  %v261 = vshrl.u32 %v260, 7
  %v262 = vsub.s32 0, %v261
  %v263 = vrot.slane %v36, %v262
  %v264 = vlaneseq
  %v265 = vshrl.u32 %v264, 7
  %v266 = vsub.s32 0, %v265
  %v267 = vrot.slane %v37, %v266
  %v268 = vmul.f32 %v258, %v263
  %v269 = vmul.f32 %v259, %v267
  %v270 = vadd.f32 %v251, %v268
  %v271 = vadd.f32 %v252, %v269
  %v272 = vmul.f32 %v270, 0.14285715
  %v273 = vmul.f32 %v271, 0.14285715
  %v274 = vld [vmem:[%s2] sm:$0x3]
  %v275 = vld [vmem:[%s3] sm:$0xf]
  %v276 = vld [vmem:[%s4] sm:$0xf]
  %278 = vset.pattern.permute.xlu0 0
  %279 = vperm.xlu0 %278, %v274
  %v280 = vpop.permute.xlu0 %279
  %v282 = vlaneseq
  %v283 = vshrl.u32 %v282, 7
  %v284 = vsub.s32 0, %v283
  %v285 = vrot.slane %v272, %v284
  %v286 = vlaneseq
  %v287 = vshrl.u32 %v286, 7
  %v288 = vsub.s32 0, %v287
  %v289 = vrot.slane %v273, %v288
  %v290 = vmul.f32 %v280, %v285
  %v291 = vmul.f32 %v280, %v289
  %292 = vset.pattern.permute.xlu0 1
  %293 = vperm.xlu0 %292, %v274
  %v294 = vpop.permute.xlu0 %293
  %v296 = vlaneseq
  %v297 = vshrl.u32 %v296, 7
  %v298 = vsub.s32 1, %v297
  %v299 = vrot.slane %v272, %v298
  %v300 = vlaneseq
  %v301 = vshrl.u32 %v300, 7
  %v302 = vsub.s32 1, %v301
  %v303 = vrot.slane %v273, %v302
  %v304 = vmul.f32 %v294, %v299
  %v305 = vmul.f32 %v294, %v303
  %v306 = vadd.f32 %v290, %v304
  %v307 = vadd.f32 %v291, %v305
  %308 = vset.pattern.permute.xlu0 2
  %309 = vperm.xlu0 %308, %v274
  %v310 = vpop.permute.xlu0 %309
  %v312 = vlaneseq
  %v313 = vshrl.u32 %v312, 7
  %v314 = vsub.s32 2, %v313
  %v315 = vrot.slane %v272, %v314
  %v316 = vlaneseq
  %v317 = vshrl.u32 %v316, 7
  %v318 = vsub.s32 2, %v317
  %v319 = vrot.slane %v273, %v318
  %v320 = vmul.f32 %v310, %v315
  %v321 = vmul.f32 %v310, %v319
  %v322 = vadd.f32 %v306, %v320
  %v323 = vadd.f32 %v307, %v321
  %324 = vset.pattern.permute.xlu0 3
  %325 = vperm.xlu0 %324, %v274
  %v326 = vpop.permute.xlu0 %325
  %v328 = vlaneseq
  %v329 = vshrl.u32 %v328, 7
  %v330 = vsub.s32 3, %v329
  %v331 = vrot.slane %v272, %v330
  %v332 = vlaneseq
  %v333 = vshrl.u32 %v332, 7
  %v334 = vsub.s32 3, %v333
  %v335 = vrot.slane %v273, %v334
  %v336 = vmul.f32 %v326, %v331
  %v337 = vmul.f32 %v326, %v335
  %v338 = vadd.f32 %v322, %v336
  %v339 = vadd.f32 %v323, %v337
  %v340 = vlaneseq
  %v341 = vshrl.u32 %v340, 7
  %v342 = vsub.s32 4, %v341
  %v343 = vrot.slane %v272, %v342
  %v344 = vlaneseq
  %v345 = vshrl.u32 %v344, 7
  %v346 = vsub.s32 4, %v345
  %v347 = vrot.slane %v273, %v346
  %v348 = vmul.f32 %v280, %v343
  %v349 = vmul.f32 %v280, %v347
  %v350 = vlaneseq
  %v351 = vshrl.u32 %v350, 7
  %v352 = vsub.s32 5, %v351
  %v353 = vrot.slane %v272, %v352
  %v354 = vlaneseq
  %v355 = vshrl.u32 %v354, 7
  %v356 = vsub.s32 5, %v355
  %v357 = vrot.slane %v273, %v356
  %v358 = vmul.f32 %v294, %v353
  %v359 = vmul.f32 %v294, %v357
  %v360 = vadd.f32 %v348, %v358
  %v361 = vadd.f32 %v349, %v359
  %v362 = vlaneseq
  %v363 = vshrl.u32 %v362, 7
  %v364 = vsub.s32 6, %v363
  %v365 = vrot.slane %v272, %v364
  %v366 = vlaneseq
  %v367 = vshrl.u32 %v366, 7
  %v368 = vsub.s32 6, %v367
  %v369 = vrot.slane %v273, %v368
  %v370 = vmul.f32 %v310, %v365
  %v371 = vmul.f32 %v310, %v369
  %v372 = vadd.f32 %v360, %v370
  %v373 = vadd.f32 %v361, %v371
  %v374 = vlaneseq
  %v375 = vshrl.u32 %v374, 7
  %v376 = vsub.s32 7, %v375
  %v377 = vrot.slane %v272, %v376
  %v378 = vlaneseq
  %v379 = vshrl.u32 %v378, 7
  %v380 = vsub.s32 7, %v379
  %v381 = vrot.slane %v273, %v380
  %v382 = vmul.f32 %v326, %v377
  %v383 = vmul.f32 %v326, %v381
  %v384 = vadd.f32 %v372, %v382
  %v385 = vadd.f32 %v373, %v383
  %v388 = vrot.slane %v384, 6
  %v389 = vrot.slane %v385, 6
  %vm392 = vcmask 1041408
  %v393 = vsel %vm392, %v338, %v388
  %v394 = vsel %vm392, %v339, %v389
  %396 = vset.pattern.permute.xlu0 0
  %397 = vperm.xlu0 %396, %v275
  %v398 = vpop.permute.xlu0 %397
  %v400 = vmul.f32 %v393, %v398
  %v401 = vmul.f32 %v394, %v398
  %402 = vset.pattern.permute.xlu0 1
  %403 = vperm.xlu0 %402, %v275
  %v404 = vpop.permute.xlu0 %403
  %v406 = vadd.f32 %v400, %v404
  %v407 = vadd.f32 %v401, %v404
  %v408 = vsub.f32 0.0, %v406
  %v409 = vsub.f32 0.0, %v407
  %v410 = vmul.f32 %v408, 1.442695
  %v411 = vpow.pop %v410
  %v412 = vmul.f32 %v409, 1.442695
  %v413 = vpow.pop %v412
  %v414 = vadd.f32 %v411, 1.0
  %v415 = vadd.f32 %v413, 1.0
  %v416 = vrcp.pop %v414
  %v417 = vrcp.pop %v415
  %v418 = vmul.f32 %v406, %v416
  %v419 = vmul.f32 %v407, %v417
  %420 = vrot.lane.b32.xlu0 %v418, 2
  %v421 = vpop.permute.xlu0 %420
  %422 = vrot.lane.b32.xlu0 %v419, 2
  %v423 = vpop.permute.xlu0 %422
  %v424 = vsel %vm63, %v421, %v423
  %v425 = vsel %vm63, %v423, %v421
  %v426 = vmul.f32 %v425, %v69
  %v427 = vmul.f32 %v424, %v73
  %428 = vrot.lane.b32.xlu0 %v418, 1
  %v429 = vpop.permute.xlu0 %428
  %430 = vrot.lane.b32.xlu0 %v419, 1
  %v431 = vpop.permute.xlu0 %430
  %v432 = vsel %vm82, %v429, %v431
  %v433 = vsel %vm82, %v431, %v429
  %v434 = vmul.f32 %v433, %v88
  %v435 = vmul.f32 %v432, %v92
  %436 = vrot.lane.b32.xlu0 %v418, 127
  %v437 = vpop.permute.xlu0 %436
  %438 = vrot.lane.b32.xlu0 %v419, 127
  %v439 = vpop.permute.xlu0 %438
  %v440 = vsel %vm103, %v437, %v439
  %v441 = vsel %vm103, %v439, %v437
  %v442 = vmul.f32 %v440, %v109
  %v443 = vmul.f32 %v441, %v113
  %444 = vrot.lane.b32.xlu0 %v418, 126
  %v445 = vpop.permute.xlu0 %444
  %446 = vrot.lane.b32.xlu0 %v419, 126
  %v447 = vpop.permute.xlu0 %446
  %v448 = vsel %vm122, %v445, %v447
  %v449 = vsel %vm122, %v447, %v445
  %v450 = vmul.f32 %v448, %v128
  %v451 = vmul.f32 %v449, %v132
  %453 = vset.pattern.permute.xlu0 0
  %454 = vperm.xlu0 %453, %v276
  %v455 = vpop.permute.xlu0 %454
  %v457 = vmul.f32 %v455, %v426
  %v458 = vmul.f32 %v455, %v427
  %459 = vset.pattern.permute.xlu0 1
  %460 = vperm.xlu0 %459, %v276
  %v461 = vpop.permute.xlu0 %460
  %v463 = vmul.f32 %v461, %v434
  %v464 = vmul.f32 %v461, %v435
  %v465 = vadd.f32 %v457, %v463
  %v466 = vadd.f32 %v458, %v464
  %467 = vset.pattern.permute.xlu0 2
  %468 = vperm.xlu0 %467, %v276
  %v469 = vpop.permute.xlu0 %468
  %v471 = vmul.f32 %v469, %v418
  %v472 = vmul.f32 %v469, %v419
  %v473 = vadd.f32 %v465, %v471
  %v474 = vadd.f32 %v466, %v472
  %475 = vset.pattern.permute.xlu0 3
  %476 = vperm.xlu0 %475, %v276
  %v477 = vpop.permute.xlu0 %476
  %v479 = vmul.f32 %v477, %v442
  %v480 = vmul.f32 %v477, %v443
  %v481 = vadd.f32 %v473, %v479
  %v482 = vadd.f32 %v474, %v480
  %483 = vset.pattern.permute.xlu0 4
  %484 = vperm.xlu0 %483, %v276
  %v485 = vpop.permute.xlu0 %484
  %v487 = vmul.f32 %v485, %v450
  %v488 = vmul.f32 %v485, %v451
  %v489 = vadd.f32 %v481, %v487
  %v490 = vadd.f32 %v482, %v488
  %491 = vrot.lane.b32.xlu0 %v489, 32
  %v492 = vpop.permute.xlu0 %491
  %493 = vrot.lane.b32.xlu0 %v490, 32
  %v494 = vpop.permute.xlu0 %493
  %v495 = vsel %vm179, %v492, %v494
  %v496 = vsel %vm179, %v494, %v492
  %v497 = vmul.f32 %v496, %v185
  %v498 = vmul.f32 %v495, %v189
  %499 = vset.pattern.permute.xlu0 5
  %500 = vperm.xlu0 %499, %v276
  %v501 = vpop.permute.xlu0 %500
  %v503 = vmul.f32 %v501, %v426
  %v504 = vmul.f32 %v501, %v427
  %505 = vset.pattern.permute.xlu0 6
  %506 = vperm.xlu0 %505, %v276
  %v507 = vpop.permute.xlu0 %506
  %v509 = vmul.f32 %v507, %v434
  %v510 = vmul.f32 %v507, %v435
  %v511 = vadd.f32 %v503, %v509
  %v512 = vadd.f32 %v504, %v510
  %513 = vset.pattern.permute.xlu0 7
  %514 = vperm.xlu0 %513, %v276
  %v515 = vpop.permute.xlu0 %514
  %v517 = vmul.f32 %v515, %v418
  %v518 = vmul.f32 %v515, %v419
  %v519 = vadd.f32 %v511, %v517
  %v520 = vadd.f32 %v512, %v518
  %521 = vset.pattern.permute.xlu0 8
  %522 = vperm.xlu0 %521, %v276
  %v523 = vpop.permute.xlu0 %522
  %v525 = vmul.f32 %v523, %v442
  %v526 = vmul.f32 %v523, %v443
  %v527 = vadd.f32 %v519, %v525
  %v528 = vadd.f32 %v520, %v526
  %529 = vset.pattern.permute.xlu0 9
  %530 = vperm.xlu0 %529, %v276
  %v531 = vpop.permute.xlu0 %530
  %v533 = vmul.f32 %v531, %v450
  %v534 = vmul.f32 %v531, %v451
  %v535 = vadd.f32 %v527, %v533
  %v536 = vadd.f32 %v528, %v534
  %537 = vrot.lane.b32.xlu0 %v535, 16
  %v538 = vpop.permute.xlu0 %537
  %539 = vrot.lane.b32.xlu0 %v536, 16
  %v540 = vpop.permute.xlu0 %539
  %v541 = vsel %vm198, %v538, %v540
  %v542 = vsel %vm198, %v540, %v538
  %v543 = vmul.f32 %v542, %v204
  %v544 = vmul.f32 %v541, %v208
  %v545 = vadd.f32 %v497, %v543
  %v546 = vadd.f32 %v498, %v544
  %547 = vset.pattern.permute.xlu0 10
  %548 = vperm.xlu0 %547, %v276
  %v549 = vpop.permute.xlu0 %548
  %v551 = vmul.f32 %v549, %v426
  %v552 = vmul.f32 %v549, %v427
  %553 = vset.pattern.permute.xlu0 11
  %554 = vperm.xlu0 %553, %v276
  %v555 = vpop.permute.xlu0 %554
  %v557 = vmul.f32 %v555, %v434
  %v558 = vmul.f32 %v555, %v435
  %v559 = vadd.f32 %v551, %v557
  %v560 = vadd.f32 %v552, %v558
  %561 = vset.pattern.permute.xlu0 12
  %562 = vperm.xlu0 %561, %v276
  %v563 = vpop.permute.xlu0 %562
  %v565 = vmul.f32 %v563, %v418
  %v566 = vmul.f32 %v563, %v419
  %v567 = vadd.f32 %v559, %v565
  %v568 = vadd.f32 %v560, %v566
  %569 = vset.pattern.permute.xlu0 13
  %570 = vperm.xlu0 %569, %v276
  %v571 = vpop.permute.xlu0 %570
  %v573 = vmul.f32 %v571, %v442
  %v574 = vmul.f32 %v571, %v443
  %v575 = vadd.f32 %v567, %v573
  %v576 = vadd.f32 %v568, %v574
  %577 = vset.pattern.permute.xlu0 14
  %578 = vperm.xlu0 %577, %v276
  %v579 = vpop.permute.xlu0 %578
  %v581 = vmul.f32 %v579, %v450
  %v582 = vmul.f32 %v579, %v451
  %v583 = vadd.f32 %v575, %v581
  %v584 = vadd.f32 %v576, %v582
  %v585 = vadd.f32 %v545, %v583
  %v586 = vadd.f32 %v546, %v584
  %587 = vset.pattern.permute.xlu0 15
  %588 = vperm.xlu0 %587, %v276
  %v589 = vpop.permute.xlu0 %588
  %v591 = vmul.f32 %v589, %v426
  %v592 = vmul.f32 %v589, %v427
  %593 = vset.pattern.permute.xlu0 16
  %594 = vperm.xlu0 %593, %v276
  %v595 = vpop.permute.xlu0 %594
  %v597 = vmul.f32 %v595, %v434
  %v598 = vmul.f32 %v595, %v435
  %v599 = vadd.f32 %v591, %v597
  %v600 = vadd.f32 %v592, %v598
  %601 = vset.pattern.permute.xlu0 17
  %602 = vperm.xlu0 %601, %v276
  %v603 = vpop.permute.xlu0 %602
  %v605 = vmul.f32 %v603, %v418
  %v606 = vmul.f32 %v603, %v419
  %v607 = vadd.f32 %v599, %v605
  %v608 = vadd.f32 %v600, %v606
  %609 = vset.pattern.permute.xlu0 18
  %610 = vperm.xlu0 %609, %v276
  %v611 = vpop.permute.xlu0 %610
  %v613 = vmul.f32 %v611, %v442
  %v614 = vmul.f32 %v611, %v443
  %v615 = vadd.f32 %v607, %v613
  %v616 = vadd.f32 %v608, %v614
  %617 = vset.pattern.permute.xlu0 19
  %618 = vperm.xlu0 %617, %v276
  %v619 = vpop.permute.xlu0 %618
  %v621 = vmul.f32 %v619, %v450
  %v622 = vmul.f32 %v619, %v451
  %v623 = vadd.f32 %v615, %v621
  %v624 = vadd.f32 %v616, %v622
  %625 = vrot.lane.b32.xlu0 %v623, 112
  %v626 = vpop.permute.xlu0 %625
  %627 = vrot.lane.b32.xlu0 %v624, 112
  %v628 = vpop.permute.xlu0 %627
  %v629 = vsel %vm219, %v626, %v628
  %v630 = vsel %vm219, %v628, %v626
  %v631 = vmul.f32 %v629, %v225
  %v632 = vmul.f32 %v630, %v229
  %v633 = vadd.f32 %v585, %v631
  %v634 = vadd.f32 %v586, %v632
  %635 = vset.pattern.permute.xlu0 20
  %636 = vperm.xlu0 %635, %v276
  %v637 = vpop.permute.xlu0 %636
  %v639 = vmul.f32 %v637, %v426
  %v640 = vmul.f32 %v637, %v427
  %641 = vset.pattern.permute.xlu0 21
  %642 = vperm.xlu0 %641, %v276
  %v643 = vpop.permute.xlu0 %642
  %v645 = vmul.f32 %v643, %v434
  %v646 = vmul.f32 %v643, %v435
  %v647 = vadd.f32 %v639, %v645
  %v648 = vadd.f32 %v640, %v646
  %649 = vset.pattern.permute.xlu0 22
  %650 = vperm.xlu0 %649, %v276
  %v651 = vpop.permute.xlu0 %650
  %v653 = vmul.f32 %v651, %v418
  %v654 = vmul.f32 %v651, %v419
  %v655 = vadd.f32 %v647, %v653
  %v656 = vadd.f32 %v648, %v654
  %657 = vset.pattern.permute.xlu0 23
  %658 = vperm.xlu0 %657, %v276
  %v659 = vpop.permute.xlu0 %658
  %v661 = vmul.f32 %v659, %v442
  %v662 = vmul.f32 %v659, %v443
  %v663 = vadd.f32 %v655, %v661
  %v664 = vadd.f32 %v656, %v662
  %665 = vset.pattern.permute.xlu0 24
  %666 = vperm.xlu0 %665, %v276
  %v667 = vpop.permute.xlu0 %666
  %v669 = vmul.f32 %v667, %v450
  %v670 = vmul.f32 %v667, %v451
  %v671 = vadd.f32 %v663, %v669
  %v672 = vadd.f32 %v664, %v670
  %673 = vrot.lane.b32.xlu0 %v671, 96
  %v674 = vpop.permute.xlu0 %673
  %675 = vrot.lane.b32.xlu0 %v672, 96
  %v676 = vpop.permute.xlu0 %675
  %v677 = vsel %vm238, %v674, %v676
  %v678 = vsel %vm238, %v676, %v674
  %v679 = vmul.f32 %v677, %v244
  %v680 = vmul.f32 %v678, %v248
  %v681 = vadd.f32 %v633, %v679
  %v682 = vadd.f32 %v634, %v680
  %683 = vset.pattern.permute.xlu0 2
  %684 = vperm.xlu0 %683, %v275
  %v685 = vpop.permute.xlu0 %684
  %v687 = vmul.f32 %v681, %v685
  %v688 = vmul.f32 %v682, %v685
  %689 = vset.pattern.permute.xlu0 3
  %690 = vperm.xlu0 %689, %v275
  %v691 = vpop.permute.xlu0 %690
  %v693 = vadd.f32 %v687, %v691
  %v694 = vadd.f32 %v688, %v691
  %v695 = vsub.f32 0.0, %v693
  %v696 = vsub.f32 0.0, %v694
  %v697 = vmul.f32 %v695, 1.442695
  %v698 = vpow.pop %v697
  %v699 = vmul.f32 %v696, 1.442695
  %v700 = vpow.pop %v699
  %v701 = vadd.f32 %v698, 1.0
  %v702 = vadd.f32 %v700, 1.0
  %v703 = vrcp.pop %v701
  %v704 = vrcp.pop %v702
  %v705 = vmul.f32 %v693, %v703
  %v706 = vmul.f32 %v694, %v704
  %v709 = vrot.slane %v705, 6
  %v710 = vrot.slane %v706, 6
  %v715 = vrot.slane %v418, 6
  %v716 = vrot.slane %v419, 6
  %v719 = vrot.slane %v705, 4
  %v720 = vrot.slane %v706, 4
  %v723 = vsel %vm392, %v418, %v709
  %v724 = vsel %vm392, %v419, %v710
  %vm725 = vcmask 1043456
  %v726 = vsel %vm725, %v723, %v715
  %v727 = vsel %vm725, %v724, %v716
  %vm728 = vcmask 1045504
  %v729 = vsel %vm728, %v726, %v719
  %v730 = vsel %vm728, %v727, %v720
  %v731 = vld [vmem:[%s5] sm:$0xff]
  %732 = vrot.lane.b32.xlu0 %v729, 5
  %v733 = vpop.permute.xlu0 %732
  %734 = vrot.lane.b32.xlu0 %v730, 5
  %v735 = vpop.permute.xlu0 %734
  %vm736 = vcmp.lt.s32.totalorder %v45, 5
  %v737 = vsel %vm736, %v733, %v735
  %v738 = vsel %vm736, %v735, %v733
  %v739 = vlaneseq
  %v740 = vshrl.u32 %v739, 7
  %v741 = vsub.s32 3, %v740
  %v742 = vrot.slane %v36, %v741
  %v743 = vlaneseq
  %v744 = vshrl.u32 %v743, 7
  %v745 = vsub.s32 3, %v744
  %v746 = vrot.slane %v37, %v745
  %v747 = vmul.f32 %v738, %v742
  %v748 = vmul.f32 %v737, %v746
  %750 = vset.pattern.permute.xlu0 0
  %751 = vperm.xlu0 %750, %v731
  %v752 = vpop.permute.xlu0 %751
  %v754 = vmul.f32 %v752, %v747
  %v755 = vmul.f32 %v752, %v748
  %756 = vrot.lane.b32.xlu0 %v729, 4
  %v757 = vpop.permute.xlu0 %756
  %758 = vrot.lane.b32.xlu0 %v730, 4
  %v759 = vpop.permute.xlu0 %758
  %vm760 = vcmp.lt.s32.totalorder %v45, 4
  %v761 = vsel %vm760, %v757, %v759
  %v762 = vsel %vm760, %v759, %v757
  %v763 = vlaneseq
  %v764 = vshrl.u32 %v763, 7
  %v765 = vsub.s32 4, %v764
  %v766 = vrot.slane %v36, %v765
  %v767 = vlaneseq
  %v768 = vshrl.u32 %v767, 7
  %v769 = vsub.s32 4, %v768
  %v770 = vrot.slane %v37, %v769
  %v771 = vmul.f32 %v762, %v766
  %v772 = vmul.f32 %v761, %v770
  %773 = vset.pattern.permute.xlu0 1
  %774 = vperm.xlu0 %773, %v731
  %v775 = vpop.permute.xlu0 %774
  %v777 = vmul.f32 %v775, %v771
  %v778 = vmul.f32 %v775, %v772
  %v779 = vadd.f32 %v754, %v777
  %v780 = vadd.f32 %v755, %v778
  %781 = vrot.lane.b32.xlu0 %v729, 3
  %v782 = vpop.permute.xlu0 %781
  %783 = vrot.lane.b32.xlu0 %v730, 3
  %v784 = vpop.permute.xlu0 %783
  %v785 = vsel %vm46, %v782, %v784
  %v786 = vsel %vm46, %v784, %v782
  %v787 = vmul.f32 %v786, %v52
  %v788 = vmul.f32 %v785, %v56
  %789 = vset.pattern.permute.xlu0 2
  %790 = vperm.xlu0 %789, %v731
  %v791 = vpop.permute.xlu0 %790
  %v793 = vmul.f32 %v791, %v787
  %v794 = vmul.f32 %v791, %v788
  %v795 = vadd.f32 %v779, %v793
  %v796 = vadd.f32 %v780, %v794
  %797 = vrot.lane.b32.xlu0 %v729, 2
  %v798 = vpop.permute.xlu0 %797
  %799 = vrot.lane.b32.xlu0 %v730, 2
  %v800 = vpop.permute.xlu0 %799
  %v801 = vsel %vm63, %v798, %v800
  %v802 = vsel %vm63, %v800, %v798
  %v803 = vmul.f32 %v802, %v69
  %v804 = vmul.f32 %v801, %v73
  %805 = vset.pattern.permute.xlu0 3
  %806 = vperm.xlu0 %805, %v731
  %v807 = vpop.permute.xlu0 %806
  %v809 = vmul.f32 %v807, %v803
  %v810 = vmul.f32 %v807, %v804
  %v811 = vadd.f32 %v795, %v809
  %v812 = vadd.f32 %v796, %v810
  %813 = vrot.lane.b32.xlu0 %v729, 1
  %v814 = vpop.permute.xlu0 %813
  %815 = vrot.lane.b32.xlu0 %v730, 1
  %v816 = vpop.permute.xlu0 %815
  %v817 = vsel %vm82, %v814, %v816
  %v818 = vsel %vm82, %v816, %v814
  %v819 = vmul.f32 %v818, %v88
  %v820 = vmul.f32 %v817, %v92
  %821 = vset.pattern.permute.xlu0 4
  %822 = vperm.xlu0 %821, %v731
  %v823 = vpop.permute.xlu0 %822
  %v825 = vmul.f32 %v823, %v819
  %v826 = vmul.f32 %v823, %v820
  %v827 = vadd.f32 %v811, %v825
  %v828 = vadd.f32 %v812, %v826
  %829 = vset.pattern.permute.xlu0 5
  %830 = vperm.xlu0 %829, %v731
  %v831 = vpop.permute.xlu0 %830
  %v833 = vmul.f32 %v831, %v729
  %v834 = vmul.f32 %v831, %v730
  %v835 = vadd.f32 %v827, %v833
  %v836 = vadd.f32 %v828, %v834
  %837 = vrot.lane.b32.xlu0 %v729, 127
  %v838 = vpop.permute.xlu0 %837
  %839 = vrot.lane.b32.xlu0 %v730, 127
  %v840 = vpop.permute.xlu0 %839
  %v841 = vsel %vm103, %v838, %v840
  %v842 = vsel %vm103, %v840, %v838
  %v843 = vmul.f32 %v841, %v109
  %v844 = vmul.f32 %v842, %v113
  %845 = vset.pattern.permute.xlu0 6
  %846 = vperm.xlu0 %845, %v731
  %v847 = vpop.permute.xlu0 %846
  %v849 = vmul.f32 %v847, %v843
  %v850 = vmul.f32 %v847, %v844
  %v851 = vadd.f32 %v835, %v849
  %v852 = vadd.f32 %v836, %v850
  %853 = vrot.lane.b32.xlu0 %v729, 126
  %v854 = vpop.permute.xlu0 %853
  %855 = vrot.lane.b32.xlu0 %v730, 126
  %v856 = vpop.permute.xlu0 %855
  %v857 = vsel %vm122, %v854, %v856
  %v858 = vsel %vm122, %v856, %v854
  %v859 = vmul.f32 %v857, %v128
  %v860 = vmul.f32 %v858, %v132
  %861 = vset.pattern.permute.xlu0 7
  %862 = vperm.xlu0 %861, %v731
  %v863 = vpop.permute.xlu0 %862
  %v865 = vmul.f32 %v863, %v859
  %v866 = vmul.f32 %v863, %v860
  %v867 = vadd.f32 %v851, %v865
  %v868 = vadd.f32 %v852, %v866
  %869 = vrot.lane.b32.xlu0 %v729, 125
  %v870 = vpop.permute.xlu0 %869
  %871 = vrot.lane.b32.xlu0 %v730, 125
  %v872 = vpop.permute.xlu0 %871
  %v873 = vsel %vm141, %v870, %v872
  %v874 = vsel %vm141, %v872, %v870
  %v875 = vmul.f32 %v873, %v147
  %v876 = vmul.f32 %v874, %v151
  %877 = vset.pattern.permute.xlu0 8
  %878 = vperm.xlu0 %877, %v731
  %v879 = vpop.permute.xlu0 %878
  %v881 = vmul.f32 %v879, %v875
  %v882 = vmul.f32 %v879, %v876
  %v883 = vadd.f32 %v867, %v881
  %v884 = vadd.f32 %v868, %v882
  %885 = vrot.lane.b32.xlu0 %v729, 124
  %v886 = vpop.permute.xlu0 %885
  %887 = vrot.lane.b32.xlu0 %v730, 124
  %v888 = vpop.permute.xlu0 %887
  %vm889 = vcmp.lt.s32.totalorder %v45, 124
  %v890 = vsel %vm889, %v886, %v888
  %v891 = vsel %vm889, %v888, %v886
  %v892 = vlaneseq
  %v893 = vshrl.u32 %v892, 7
  %v894 = vsub.s32 4, %v893
  %v895 = vrot.slane %v38, %v894
  %v896 = vlaneseq
  %v897 = vshrl.u32 %v896, 7
  %v898 = vsub.s32 4, %v897
  %v899 = vrot.slane %v39, %v898
  %v900 = vmul.f32 %v890, %v895
  %v901 = vmul.f32 %v891, %v899
  %902 = vset.pattern.permute.xlu0 9
  %903 = vperm.xlu0 %902, %v731
  %v904 = vpop.permute.xlu0 %903
  %v906 = vmul.f32 %v904, %v900
  %v907 = vmul.f32 %v904, %v901
  %v908 = vadd.f32 %v883, %v906
  %v909 = vadd.f32 %v884, %v907
  %910 = vrot.lane.b32.xlu0 %v729, 123
  %v911 = vpop.permute.xlu0 %910
  %912 = vrot.lane.b32.xlu0 %v730, 123
  %v913 = vpop.permute.xlu0 %912
  %vm914 = vcmp.lt.s32.totalorder %v45, 123
  %v915 = vsel %vm914, %v911, %v913
  %v916 = vsel %vm914, %v913, %v911
  %v917 = vlaneseq
  %v918 = vshrl.u32 %v917, 7
  %v919 = vsub.s32 5, %v918
  %v920 = vrot.slane %v38, %v919
  %v921 = vlaneseq
  %v922 = vshrl.u32 %v921, 7
  %v923 = vsub.s32 5, %v922
  %v924 = vrot.slane %v39, %v923
  %v925 = vmul.f32 %v915, %v920
  %v926 = vmul.f32 %v916, %v924
  %927 = vset.pattern.permute.xlu0 10
  %928 = vperm.xlu0 %927, %v731
  %v929 = vpop.permute.xlu0 %928
  %v931 = vmul.f32 %v929, %v925
  %v932 = vmul.f32 %v929, %v926
  %v933 = vadd.f32 %v908, %v931
  %v934 = vadd.f32 %v909, %v932
  %935 = vset.pattern.permute.xlu0 11
  %936 = vperm.xlu0 %935, %v731
  %v937 = vpop.permute.xlu0 %936
  %v939 = vadd.f32 %v933, %v937
  %v940 = vadd.f32 %v934, %v937
  %941 = vrot.lane.b32.xlu0 %v939, 80
  %v942 = vpop.permute.xlu0 %941
  %943 = vrot.lane.b32.xlu0 %v940, 80
  %v944 = vpop.permute.xlu0 %943
  %v945 = vsel %vm257, %v942, %v944
  %v946 = vsel %vm257, %v944, %v942
  %v947 = vlaneseq
  %v948 = vshrl.u32 %v947, 7
  %v949 = vsub.s32 0, %v948
  %v950 = vrot.slane %v34, %v949
  %v951 = vlaneseq
  %v952 = vshrl.u32 %v951, 7
  %v953 = vsub.s32 0, %v952
  %v954 = vrot.slane %v35, %v953
  %v955 = vmul.f32 %v946, %v950
  %v956 = vmul.f32 %v945, %v954
  %957 = vset.pattern.permute.xlu0 12
  %958 = vperm.xlu0 %957, %v731
  %v959 = vpop.permute.xlu0 %958
  %v961 = vmul.f32 %v959, %v955
  %v962 = vmul.f32 %v959, %v956
  %963 = vrot.lane.b32.xlu0 %v939, 64
  %v964 = vpop.permute.xlu0 %963
  %965 = vrot.lane.b32.xlu0 %v940, 64
  %v966 = vpop.permute.xlu0 %965
  %vm967 = vcmp.lt.s32.totalorder %v45, 64
  %v968 = vsel %vm967, %v964, %v966
  %v969 = vsel %vm967, %v966, %v964
  %v970 = vlaneseq
  %v971 = vshrl.u32 %v970, 7
  %v972 = vsub.s32 1, %v971
  %v973 = vrot.slane %v34, %v972
  %v974 = vlaneseq
  %v975 = vshrl.u32 %v974, 7
  %v976 = vsub.s32 1, %v975
  %v977 = vrot.slane %v35, %v976
  %v978 = vmul.f32 %v969, %v973
  %v979 = vmul.f32 %v968, %v977
  %980 = vset.pattern.permute.xlu0 13
  %981 = vperm.xlu0 %980, %v731
  %v982 = vpop.permute.xlu0 %981
  %v984 = vmul.f32 %v982, %v978
  %v985 = vmul.f32 %v982, %v979
  %v986 = vadd.f32 %v961, %v984
  %v987 = vadd.f32 %v962, %v985
  %988 = vrot.lane.b32.xlu0 %v939, 48
  %v989 = vpop.permute.xlu0 %988
  %990 = vrot.lane.b32.xlu0 %v940, 48
  %v991 = vpop.permute.xlu0 %990
  %v992 = vsel %vm162, %v989, %v991
  %v993 = vsel %vm162, %v991, %v989
  %v994 = vmul.f32 %v993, %v168
  %v995 = vmul.f32 %v992, %v172
  %996 = vset.pattern.permute.xlu0 14
  %997 = vperm.xlu0 %996, %v731
  %v998 = vpop.permute.xlu0 %997
  %v1000 = vmul.f32 %v998, %v994
  %v1001 = vmul.f32 %v998, %v995
  %v1002 = vadd.f32 %v986, %v1000
  %v1003 = vadd.f32 %v987, %v1001
  %1004 = vrot.lane.b32.xlu0 %v939, 32
  %v1005 = vpop.permute.xlu0 %1004
  %1006 = vrot.lane.b32.xlu0 %v940, 32
  %v1007 = vpop.permute.xlu0 %1006
  %v1008 = vsel %vm179, %v1005, %v1007
  %v1009 = vsel %vm179, %v1007, %v1005
  %v1010 = vmul.f32 %v1009, %v185
  %v1011 = vmul.f32 %v1008, %v189
  %1012 = vset.pattern.permute.xlu0 15
  %1013 = vperm.xlu0 %1012, %v731
  %v1014 = vpop.permute.xlu0 %1013
  %v1016 = vmul.f32 %v1014, %v1010
  %v1017 = vmul.f32 %v1014, %v1011
  %v1018 = vadd.f32 %v1002, %v1016
  %v1019 = vadd.f32 %v1003, %v1017
  %1020 = vrot.lane.b32.xlu0 %v939, 16
  %v1021 = vpop.permute.xlu0 %1020
  %1022 = vrot.lane.b32.xlu0 %v940, 16
  %v1023 = vpop.permute.xlu0 %1022
  %v1024 = vsel %vm198, %v1021, %v1023
  %v1025 = vsel %vm198, %v1023, %v1021
  %v1026 = vmul.f32 %v1025, %v204
  %v1027 = vmul.f32 %v1024, %v208
  %1028 = vset.pattern.permute.xlu0 16
  %1029 = vperm.xlu0 %1028, %v731
  %v1030 = vpop.permute.xlu0 %1029
  %v1032 = vmul.f32 %v1030, %v1026
  %v1033 = vmul.f32 %v1030, %v1027
  %v1034 = vadd.f32 %v1018, %v1032
  %v1035 = vadd.f32 %v1019, %v1033
  %1036 = vset.pattern.permute.xlu0 17
  %1037 = vperm.xlu0 %1036, %v731
  %v1038 = vpop.permute.xlu0 %1037
  %v1040 = vmul.f32 %v1038, %v939
  %v1041 = vmul.f32 %v1038, %v940
  %v1042 = vadd.f32 %v1034, %v1040
  %v1043 = vadd.f32 %v1035, %v1041
  %1044 = vrot.lane.b32.xlu0 %v939, 112
  %v1045 = vpop.permute.xlu0 %1044
  %1046 = vrot.lane.b32.xlu0 %v940, 112
  %v1047 = vpop.permute.xlu0 %1046
  %v1048 = vsel %vm219, %v1045, %v1047
  %v1049 = vsel %vm219, %v1047, %v1045
  %v1050 = vmul.f32 %v1048, %v225
  %v1051 = vmul.f32 %v1049, %v229
  %1052 = vset.pattern.permute.xlu0 18
  %1053 = vperm.xlu0 %1052, %v731
  %v1054 = vpop.permute.xlu0 %1053
  %v1056 = vmul.f32 %v1054, %v1050
  %v1057 = vmul.f32 %v1054, %v1051
  %v1058 = vadd.f32 %v1042, %v1056
  %v1059 = vadd.f32 %v1043, %v1057
  %1060 = vrot.lane.b32.xlu0 %v939, 96
  %v1061 = vpop.permute.xlu0 %1060
  %1062 = vrot.lane.b32.xlu0 %v940, 96
  %v1063 = vpop.permute.xlu0 %1062
  %v1064 = vsel %vm238, %v1061, %v1063
  %v1065 = vsel %vm238, %v1063, %v1061
  %v1066 = vmul.f32 %v1064, %v244
  %v1067 = vmul.f32 %v1065, %v248
  %1068 = vset.pattern.permute.xlu0 19
  %1069 = vperm.xlu0 %1068, %v731
  %v1070 = vpop.permute.xlu0 %1069
  %v1072 = vmul.f32 %v1070, %v1066
  %v1073 = vmul.f32 %v1070, %v1067
  %v1074 = vadd.f32 %v1058, %v1072
  %v1075 = vadd.f32 %v1059, %v1073
  %v1076 = vmul.f32 %v945, %v263
  %v1077 = vmul.f32 %v946, %v267
  %1078 = vset.pattern.permute.xlu0 20
  %1079 = vperm.xlu0 %1078, %v731
  %v1080 = vpop.permute.xlu0 %1079
  %v1082 = vmul.f32 %v1080, %v1076
  %v1083 = vmul.f32 %v1080, %v1077
  %v1084 = vadd.f32 %v1074, %v1082
  %v1085 = vadd.f32 %v1075, %v1083
  %v1086 = vlaneseq
  %v1087 = vshrl.u32 %v1086, 7
  %v1088 = vsub.s32 1, %v1087
  %v1089 = vrot.slane %v36, %v1088
  %v1090 = vlaneseq
  %v1091 = vshrl.u32 %v1090, 7
  %v1092 = vsub.s32 1, %v1091
  %v1093 = vrot.slane %v37, %v1092
  %v1094 = vmul.f32 %v968, %v1089
  %v1095 = vmul.f32 %v969, %v1093
  %1096 = vset.pattern.permute.xlu0 21
  %1097 = vperm.xlu0 %1096, %v731
  %v1098 = vpop.permute.xlu0 %1097
  %v1100 = vmul.f32 %v1098, %v1094
  %v1101 = vmul.f32 %v1098, %v1095
  %v1102 = vadd.f32 %v1084, %v1100
  %v1103 = vadd.f32 %v1085, %v1101
  %v1104 = vlaneseq
  %v1105 = vshrl.u32 %v1104, 7
  %v1106 = vsub.s32 2, %v1105
  %v1107 = vrot.slane %v36, %v1106
  %v1108 = vlaneseq
  %v1109 = vshrl.u32 %v1108, 7
  %v1110 = vsub.s32 2, %v1109
  %v1111 = vrot.slane %v37, %v1110
  %v1112 = vmul.f32 %v992, %v1107
  %v1113 = vmul.f32 %v993, %v1111
  %1114 = vset.pattern.permute.xlu0 22
  %1115 = vperm.xlu0 %1114, %v731
  %v1116 = vpop.permute.xlu0 %1115
  %v1118 = vmul.f32 %v1116, %v1112
  %v1119 = vmul.f32 %v1116, %v1113
  %v1120 = vadd.f32 %v1102, %v1118
  %v1121 = vadd.f32 %v1103, %v1119
  %1122 = vset.pattern.permute.xlu0 23
  %1123 = vperm.xlu0 %1122, %v731
  %v1124 = vpop.permute.xlu0 %1123
  %v1126 = vadd.f32 %v1120, %v1124
  %v1127 = vadd.f32 %v1121, %v1124
  %v1128 = vld [vmem:[%s6] sm:$0x3]
  %v1129 = vld [vmem:[%s7] sm:$0xf]
  %v1130 = vld [vmem:[%s8] sm:$0xf]
  %1132 = vset.pattern.permute.xlu0 0
  %1133 = vperm.xlu0 %1132, %v1128
  %v1134 = vpop.permute.xlu0 %1133
  %v1136 = vlaneseq
  %v1137 = vshrl.u32 %v1136, 7
  %v1138 = vsub.s32 0, %v1137
  %v1139 = vrot.slane %v1126, %v1138
  %v1140 = vlaneseq
  %v1141 = vshrl.u32 %v1140, 7
  %v1142 = vsub.s32 0, %v1141
  %v1143 = vrot.slane %v1127, %v1142
  %v1144 = vmul.f32 %v1134, %v1139
  %v1145 = vmul.f32 %v1134, %v1143
  %1146 = vset.pattern.permute.xlu0 1
  %1147 = vperm.xlu0 %1146, %v1128
  %v1148 = vpop.permute.xlu0 %1147
  %v1150 = vlaneseq
  %v1151 = vshrl.u32 %v1150, 7
  %v1152 = vsub.s32 1, %v1151
  %v1153 = vrot.slane %v1126, %v1152
  %v1154 = vlaneseq
  %v1155 = vshrl.u32 %v1154, 7
  %v1156 = vsub.s32 1, %v1155
  %v1157 = vrot.slane %v1127, %v1156
  %v1158 = vmul.f32 %v1148, %v1153
  %v1159 = vmul.f32 %v1148, %v1157
  %v1160 = vadd.f32 %v1144, %v1158
  %v1161 = vadd.f32 %v1145, %v1159
  %1162 = vset.pattern.permute.xlu0 2
  %1163 = vperm.xlu0 %1162, %v1128
  %v1164 = vpop.permute.xlu0 %1163
  %v1166 = vlaneseq
  %v1167 = vshrl.u32 %v1166, 7
  %v1168 = vsub.s32 2, %v1167
  %v1169 = vrot.slane %v1126, %v1168
  %v1170 = vlaneseq
  %v1171 = vshrl.u32 %v1170, 7
  %v1172 = vsub.s32 2, %v1171
  %v1173 = vrot.slane %v1127, %v1172
  %v1174 = vmul.f32 %v1164, %v1169
  %v1175 = vmul.f32 %v1164, %v1173
  %v1176 = vadd.f32 %v1160, %v1174
  %v1177 = vadd.f32 %v1161, %v1175
  %1178 = vset.pattern.permute.xlu0 3
  %1179 = vperm.xlu0 %1178, %v1128
  %v1180 = vpop.permute.xlu0 %1179
  %v1182 = vlaneseq
  %v1183 = vshrl.u32 %v1182, 7
  %v1184 = vsub.s32 3, %v1183
  %v1185 = vrot.slane %v1126, %v1184
  %v1186 = vlaneseq
  %v1187 = vshrl.u32 %v1186, 7
  %v1188 = vsub.s32 3, %v1187
  %v1189 = vrot.slane %v1127, %v1188
  %v1190 = vmul.f32 %v1180, %v1185
  %v1191 = vmul.f32 %v1180, %v1189
  %v1192 = vadd.f32 %v1176, %v1190
  %v1193 = vadd.f32 %v1177, %v1191
  %v1194 = vlaneseq
  %v1195 = vshrl.u32 %v1194, 7
  %v1196 = vsub.s32 4, %v1195
  %v1197 = vrot.slane %v1126, %v1196
  %v1198 = vlaneseq
  %v1199 = vshrl.u32 %v1198, 7
  %v1200 = vsub.s32 4, %v1199
  %v1201 = vrot.slane %v1127, %v1200
  %v1202 = vmul.f32 %v1134, %v1197
  %v1203 = vmul.f32 %v1134, %v1201
  %v1204 = vlaneseq
  %v1205 = vshrl.u32 %v1204, 7
  %v1206 = vsub.s32 5, %v1205
  %v1207 = vrot.slane %v1126, %v1206
  %v1208 = vlaneseq
  %v1209 = vshrl.u32 %v1208, 7
  %v1210 = vsub.s32 5, %v1209
  %v1211 = vrot.slane %v1127, %v1210
  %v1212 = vmul.f32 %v1148, %v1207
  %v1213 = vmul.f32 %v1148, %v1211
  %v1214 = vadd.f32 %v1202, %v1212
  %v1215 = vadd.f32 %v1203, %v1213
  %v1216 = vlaneseq
  %v1217 = vshrl.u32 %v1216, 7
  %v1218 = vsub.s32 6, %v1217
  %v1219 = vrot.slane %v1126, %v1218
  %v1220 = vlaneseq
  %v1221 = vshrl.u32 %v1220, 7
  %v1222 = vsub.s32 6, %v1221
  %v1223 = vrot.slane %v1127, %v1222
  %v1224 = vmul.f32 %v1164, %v1219
  %v1225 = vmul.f32 %v1164, %v1223
  %v1226 = vadd.f32 %v1214, %v1224
  %v1227 = vadd.f32 %v1215, %v1225
  %v1228 = vlaneseq
  %v1229 = vshrl.u32 %v1228, 7
  %v1230 = vsub.s32 7, %v1229
  %v1231 = vrot.slane %v1126, %v1230
  %v1232 = vlaneseq
  %v1233 = vshrl.u32 %v1232, 7
  %v1234 = vsub.s32 7, %v1233
  %v1235 = vrot.slane %v1127, %v1234
  %v1236 = vmul.f32 %v1180, %v1231
  %v1237 = vmul.f32 %v1180, %v1235
  %v1238 = vadd.f32 %v1226, %v1236
  %v1239 = vadd.f32 %v1227, %v1237
  %v1242 = vrot.slane %v1238, 6
  %v1243 = vrot.slane %v1239, 6
  %v1246 = vsel %vm392, %v1192, %v1242
  %v1247 = vsel %vm392, %v1193, %v1243
  %1249 = vset.pattern.permute.xlu0 0
  %1250 = vperm.xlu0 %1249, %v1129
  %v1251 = vpop.permute.xlu0 %1250
  %v1253 = vmul.f32 %v1246, %v1251
  %v1254 = vmul.f32 %v1247, %v1251
  %1255 = vset.pattern.permute.xlu0 1
  %1256 = vperm.xlu0 %1255, %v1129
  %v1257 = vpop.permute.xlu0 %1256
  %v1259 = vadd.f32 %v1253, %v1257
  %v1260 = vadd.f32 %v1254, %v1257
  %v1261 = vsub.f32 0.0, %v1259
  %v1262 = vsub.f32 0.0, %v1260
  %v1263 = vmul.f32 %v1261, 1.442695
  %v1264 = vpow.pop %v1263
  %v1265 = vmul.f32 %v1262, 1.442695
  %v1266 = vpow.pop %v1265
  %v1267 = vadd.f32 %v1264, 1.0
  %v1268 = vadd.f32 %v1266, 1.0
  %v1269 = vrcp.pop %v1267
  %v1270 = vrcp.pop %v1268
  %v1271 = vmul.f32 %v1259, %v1269
  %v1272 = vmul.f32 %v1260, %v1270
  %1273 = vrot.lane.b32.xlu0 %v1271, 2
  %v1274 = vpop.permute.xlu0 %1273
  %1275 = vrot.lane.b32.xlu0 %v1272, 2
  %v1276 = vpop.permute.xlu0 %1275
  %v1277 = vsel %vm63, %v1274, %v1276
  %v1278 = vsel %vm63, %v1276, %v1274
  %v1279 = vmul.f32 %v1278, %v69
  %v1280 = vmul.f32 %v1277, %v73
  %1281 = vrot.lane.b32.xlu0 %v1271, 1
  %v1282 = vpop.permute.xlu0 %1281
  %1283 = vrot.lane.b32.xlu0 %v1272, 1
  %v1284 = vpop.permute.xlu0 %1283
  %v1285 = vsel %vm82, %v1282, %v1284
  %v1286 = vsel %vm82, %v1284, %v1282
  %v1287 = vmul.f32 %v1286, %v88
  %v1288 = vmul.f32 %v1285, %v92
  %1289 = vrot.lane.b32.xlu0 %v1271, 127
  %v1290 = vpop.permute.xlu0 %1289
  %1291 = vrot.lane.b32.xlu0 %v1272, 127
  %v1292 = vpop.permute.xlu0 %1291
  %v1293 = vsel %vm103, %v1290, %v1292
  %v1294 = vsel %vm103, %v1292, %v1290
  %v1295 = vmul.f32 %v1293, %v109
  %v1296 = vmul.f32 %v1294, %v113
  %1297 = vrot.lane.b32.xlu0 %v1271, 126
  %v1298 = vpop.permute.xlu0 %1297
  %1299 = vrot.lane.b32.xlu0 %v1272, 126
  %v1300 = vpop.permute.xlu0 %1299
  %v1301 = vsel %vm122, %v1298, %v1300
  %v1302 = vsel %vm122, %v1300, %v1298
  %v1303 = vmul.f32 %v1301, %v128
  %v1304 = vmul.f32 %v1302, %v132
  %1306 = vset.pattern.permute.xlu0 0
  %1307 = vperm.xlu0 %1306, %v1130
  %v1308 = vpop.permute.xlu0 %1307
  %v1310 = vmul.f32 %v1308, %v1279
  %v1311 = vmul.f32 %v1308, %v1280
  %1312 = vset.pattern.permute.xlu0 1
  %1313 = vperm.xlu0 %1312, %v1130
  %v1314 = vpop.permute.xlu0 %1313
  %v1316 = vmul.f32 %v1314, %v1287
  %v1317 = vmul.f32 %v1314, %v1288
  %v1318 = vadd.f32 %v1310, %v1316
  %v1319 = vadd.f32 %v1311, %v1317
  %1320 = vset.pattern.permute.xlu0 2
  %1321 = vperm.xlu0 %1320, %v1130
  %v1322 = vpop.permute.xlu0 %1321
  %v1324 = vmul.f32 %v1322, %v1271
  %v1325 = vmul.f32 %v1322, %v1272
  %v1326 = vadd.f32 %v1318, %v1324
  %v1327 = vadd.f32 %v1319, %v1325
  %1328 = vset.pattern.permute.xlu0 3
  %1329 = vperm.xlu0 %1328, %v1130
  %v1330 = vpop.permute.xlu0 %1329
  %v1332 = vmul.f32 %v1330, %v1295
  %v1333 = vmul.f32 %v1330, %v1296
  %v1334 = vadd.f32 %v1326, %v1332
  %v1335 = vadd.f32 %v1327, %v1333
  %1336 = vset.pattern.permute.xlu0 4
  %1337 = vperm.xlu0 %1336, %v1130
  %v1338 = vpop.permute.xlu0 %1337
  %v1340 = vmul.f32 %v1338, %v1303
  %v1341 = vmul.f32 %v1338, %v1304
  %v1342 = vadd.f32 %v1334, %v1340
  %v1343 = vadd.f32 %v1335, %v1341
  %1344 = vrot.lane.b32.xlu0 %v1342, 32
  %v1345 = vpop.permute.xlu0 %1344
  %1346 = vrot.lane.b32.xlu0 %v1343, 32
  %v1347 = vpop.permute.xlu0 %1346
  %v1348 = vsel %vm179, %v1345, %v1347
  %v1349 = vsel %vm179, %v1347, %v1345
  %v1350 = vmul.f32 %v1349, %v185
  %v1351 = vmul.f32 %v1348, %v189
  %1352 = vset.pattern.permute.xlu0 5
  %1353 = vperm.xlu0 %1352, %v1130
  %v1354 = vpop.permute.xlu0 %1353
  %v1356 = vmul.f32 %v1354, %v1279
  %v1357 = vmul.f32 %v1354, %v1280
  %1358 = vset.pattern.permute.xlu0 6
  %1359 = vperm.xlu0 %1358, %v1130
  %v1360 = vpop.permute.xlu0 %1359
  %v1362 = vmul.f32 %v1360, %v1287
  %v1363 = vmul.f32 %v1360, %v1288
  %v1364 = vadd.f32 %v1356, %v1362
  %v1365 = vadd.f32 %v1357, %v1363
  %1366 = vset.pattern.permute.xlu0 7
  %1367 = vperm.xlu0 %1366, %v1130
  %v1368 = vpop.permute.xlu0 %1367
  %v1370 = vmul.f32 %v1368, %v1271
  %v1371 = vmul.f32 %v1368, %v1272
  %v1372 = vadd.f32 %v1364, %v1370
  %v1373 = vadd.f32 %v1365, %v1371
  %1374 = vset.pattern.permute.xlu0 8
  %1375 = vperm.xlu0 %1374, %v1130
  %v1376 = vpop.permute.xlu0 %1375
  %v1378 = vmul.f32 %v1376, %v1295
  %v1379 = vmul.f32 %v1376, %v1296
  %v1380 = vadd.f32 %v1372, %v1378
  %v1381 = vadd.f32 %v1373, %v1379
  %1382 = vset.pattern.permute.xlu0 9
  %1383 = vperm.xlu0 %1382, %v1130
  %v1384 = vpop.permute.xlu0 %1383
  %v1386 = vmul.f32 %v1384, %v1303
  %v1387 = vmul.f32 %v1384, %v1304
  %v1388 = vadd.f32 %v1380, %v1386
  %v1389 = vadd.f32 %v1381, %v1387
  %1390 = vrot.lane.b32.xlu0 %v1388, 16
  %v1391 = vpop.permute.xlu0 %1390
  %1392 = vrot.lane.b32.xlu0 %v1389, 16
  %v1393 = vpop.permute.xlu0 %1392
  %v1394 = vsel %vm198, %v1391, %v1393
  %v1395 = vsel %vm198, %v1393, %v1391
  %v1396 = vmul.f32 %v1395, %v204
  %v1397 = vmul.f32 %v1394, %v208
  %v1398 = vadd.f32 %v1350, %v1396
  %v1399 = vadd.f32 %v1351, %v1397
  %1400 = vset.pattern.permute.xlu0 10
  %1401 = vperm.xlu0 %1400, %v1130
  %v1402 = vpop.permute.xlu0 %1401
  %v1404 = vmul.f32 %v1402, %v1279
  %v1405 = vmul.f32 %v1402, %v1280
  %1406 = vset.pattern.permute.xlu0 11
  %1407 = vperm.xlu0 %1406, %v1130
  %v1408 = vpop.permute.xlu0 %1407
  %v1410 = vmul.f32 %v1408, %v1287
  %v1411 = vmul.f32 %v1408, %v1288
  %v1412 = vadd.f32 %v1404, %v1410
  %v1413 = vadd.f32 %v1405, %v1411
  %1414 = vset.pattern.permute.xlu0 12
  %1415 = vperm.xlu0 %1414, %v1130
  %v1416 = vpop.permute.xlu0 %1415
  %v1418 = vmul.f32 %v1416, %v1271
  %v1419 = vmul.f32 %v1416, %v1272
  %v1420 = vadd.f32 %v1412, %v1418
  %v1421 = vadd.f32 %v1413, %v1419
  %1422 = vset.pattern.permute.xlu0 13
  %1423 = vperm.xlu0 %1422, %v1130
  %v1424 = vpop.permute.xlu0 %1423
  %v1426 = vmul.f32 %v1424, %v1295
  %v1427 = vmul.f32 %v1424, %v1296
  %v1428 = vadd.f32 %v1420, %v1426
  %v1429 = vadd.f32 %v1421, %v1427
  %1430 = vset.pattern.permute.xlu0 14
  %1431 = vperm.xlu0 %1430, %v1130
  %v1432 = vpop.permute.xlu0 %1431
  %v1434 = vmul.f32 %v1432, %v1303
  %v1435 = vmul.f32 %v1432, %v1304
  %v1436 = vadd.f32 %v1428, %v1434
  %v1437 = vadd.f32 %v1429, %v1435
  %v1438 = vadd.f32 %v1398, %v1436
  %v1439 = vadd.f32 %v1399, %v1437
  %1440 = vset.pattern.permute.xlu0 15
  %1441 = vperm.xlu0 %1440, %v1130
  %v1442 = vpop.permute.xlu0 %1441
  %v1444 = vmul.f32 %v1442, %v1279
  %v1445 = vmul.f32 %v1442, %v1280
  %1446 = vset.pattern.permute.xlu0 16
  %1447 = vperm.xlu0 %1446, %v1130
  %v1448 = vpop.permute.xlu0 %1447
  %v1450 = vmul.f32 %v1448, %v1287
  %v1451 = vmul.f32 %v1448, %v1288
  %v1452 = vadd.f32 %v1444, %v1450
  %v1453 = vadd.f32 %v1445, %v1451
  %1454 = vset.pattern.permute.xlu0 17
  %1455 = vperm.xlu0 %1454, %v1130
  %v1456 = vpop.permute.xlu0 %1455
  %v1458 = vmul.f32 %v1456, %v1271
  %v1459 = vmul.f32 %v1456, %v1272
  %v1460 = vadd.f32 %v1452, %v1458
  %v1461 = vadd.f32 %v1453, %v1459
  %1462 = vset.pattern.permute.xlu0 18
  %1463 = vperm.xlu0 %1462, %v1130
  %v1464 = vpop.permute.xlu0 %1463
  %v1466 = vmul.f32 %v1464, %v1295
  %v1467 = vmul.f32 %v1464, %v1296
  %v1468 = vadd.f32 %v1460, %v1466
  %v1469 = vadd.f32 %v1461, %v1467
  %1470 = vset.pattern.permute.xlu0 19
  %1471 = vperm.xlu0 %1470, %v1130
  %v1472 = vpop.permute.xlu0 %1471
  %v1474 = vmul.f32 %v1472, %v1303
  %v1475 = vmul.f32 %v1472, %v1304
  %v1476 = vadd.f32 %v1468, %v1474
  %v1477 = vadd.f32 %v1469, %v1475
  %1478 = vrot.lane.b32.xlu0 %v1476, 112
  %v1479 = vpop.permute.xlu0 %1478
  %1480 = vrot.lane.b32.xlu0 %v1477, 112
  %v1481 = vpop.permute.xlu0 %1480
  %v1482 = vsel %vm219, %v1479, %v1481
  %v1483 = vsel %vm219, %v1481, %v1479
  %v1484 = vmul.f32 %v1482, %v225
  %v1485 = vmul.f32 %v1483, %v229
  %v1486 = vadd.f32 %v1438, %v1484
  %v1487 = vadd.f32 %v1439, %v1485
  %1488 = vset.pattern.permute.xlu0 20
  %1489 = vperm.xlu0 %1488, %v1130
  %v1490 = vpop.permute.xlu0 %1489
  %v1492 = vmul.f32 %v1490, %v1279
  %v1493 = vmul.f32 %v1490, %v1280
  %1494 = vset.pattern.permute.xlu0 21
  %1495 = vperm.xlu0 %1494, %v1130
  %v1496 = vpop.permute.xlu0 %1495
  %v1498 = vmul.f32 %v1496, %v1287
  %v1499 = vmul.f32 %v1496, %v1288
  %v1500 = vadd.f32 %v1492, %v1498
  %v1501 = vadd.f32 %v1493, %v1499
  %1502 = vset.pattern.permute.xlu0 22
  %1503 = vperm.xlu0 %1502, %v1130
  %v1504 = vpop.permute.xlu0 %1503
  %v1506 = vmul.f32 %v1504, %v1271
  %v1507 = vmul.f32 %v1504, %v1272
  %v1508 = vadd.f32 %v1500, %v1506
  %v1509 = vadd.f32 %v1501, %v1507
  %1510 = vset.pattern.permute.xlu0 23
  %1511 = vperm.xlu0 %1510, %v1130
  %v1512 = vpop.permute.xlu0 %1511
  %v1514 = vmul.f32 %v1512, %v1295
  %v1515 = vmul.f32 %v1512, %v1296
  %v1516 = vadd.f32 %v1508, %v1514
  %v1517 = vadd.f32 %v1509, %v1515
  %1518 = vset.pattern.permute.xlu0 24
  %1519 = vperm.xlu0 %1518, %v1130
  %v1520 = vpop.permute.xlu0 %1519
  %v1522 = vmul.f32 %v1520, %v1303
  %v1523 = vmul.f32 %v1520, %v1304
  %v1524 = vadd.f32 %v1516, %v1522
  %v1525 = vadd.f32 %v1517, %v1523
  %1526 = vrot.lane.b32.xlu0 %v1524, 96
  %v1527 = vpop.permute.xlu0 %1526
  %1528 = vrot.lane.b32.xlu0 %v1525, 96
  %v1529 = vpop.permute.xlu0 %1528
  %v1530 = vsel %vm238, %v1527, %v1529
  %v1531 = vsel %vm238, %v1529, %v1527
  %v1532 = vmul.f32 %v1530, %v244
  %v1533 = vmul.f32 %v1531, %v248
  %v1534 = vadd.f32 %v1486, %v1532
  %v1535 = vadd.f32 %v1487, %v1533
  %1536 = vset.pattern.permute.xlu0 2
  %1537 = vperm.xlu0 %1536, %v1129
  %v1538 = vpop.permute.xlu0 %1537
  %v1540 = vmul.f32 %v1534, %v1538
  %v1541 = vmul.f32 %v1535, %v1538
  %1542 = vset.pattern.permute.xlu0 3
  %1543 = vperm.xlu0 %1542, %v1129
  %v1544 = vpop.permute.xlu0 %1543
  %v1546 = vadd.f32 %v1540, %v1544
  %v1547 = vadd.f32 %v1541, %v1544
  %v1548 = vsub.f32 0.0, %v1546
  %v1549 = vsub.f32 0.0, %v1547
  %v1550 = vmul.f32 %v1548, 1.442695
  %v1551 = vpow.pop %v1550
  %v1552 = vmul.f32 %v1549, 1.442695
  %v1553 = vpow.pop %v1552
  %v1554 = vadd.f32 %v1551, 1.0
  %v1555 = vadd.f32 %v1553, 1.0
  %v1556 = vrcp.pop %v1554
  %v1557 = vrcp.pop %v1555
  %v1558 = vmul.f32 %v1546, %v1556
  %v1559 = vmul.f32 %v1547, %v1557
  %v1562 = vrot.slane %v1558, 7
  %v1563 = vrot.slane %v1559, 7
  %v1568 = vrot.slane %v1271, 7
  %v1569 = vrot.slane %v1272, 7
  %v1572 = vrot.slane %v1558, 6
  %v1573 = vrot.slane %v1559, 6
  %v1576 = vrot.slane %v1271, 6
  %v1577 = vrot.slane %v1272, 6
  %v1580 = vrot.slane %v1558, 5
  %v1581 = vrot.slane %v1559, 5
  %v1584 = vrot.slane %v1271, 5
  %v1585 = vrot.slane %v1272, 5
  %v1588 = vrot.slane %v1558, 4
  %v1589 = vrot.slane %v1559, 4
  %vm1592 = vcmask 1040384
  %v1593 = vsel %vm1592, %v1271, %v1562
  %v1594 = vsel %vm1592, %v1272, %v1563
  %v1595 = vsel %vm392, %v1593, %v1568
  %v1596 = vsel %vm392, %v1594, %v1569
  %vm1597 = vcmask 1042432
  %v1598 = vsel %vm1597, %v1595, %v1572
  %v1599 = vsel %vm1597, %v1596, %v1573
  %v1600 = vsel %vm725, %v1598, %v1576
  %v1601 = vsel %vm725, %v1599, %v1577
  %vm1602 = vcmask 1044480
  %v1603 = vsel %vm1602, %v1600, %v1580
  %v1604 = vsel %vm1602, %v1601, %v1581
  %v1605 = vsel %vm728, %v1603, %v1584
  %v1606 = vsel %vm728, %v1604, %v1585
  %vm1607 = vcmask 1046528
  %v1608 = vsel %vm1607, %v1605, %v1588
  %v1609 = vsel %vm1607, %v1606, %v1589
  %v1610 = vsub.f32 0.0, %v1608
  %v1611 = vsub.f32 0.0, %v1609
  %v1612 = vmul.f32 %v1610, 1.442695
  %v1613 = vpow.pop %v1612
  %v1614 = vmul.f32 %v1611, 1.442695
  %v1615 = vpow.pop %v1614
  %v1616 = vadd.f32 %v1613, 1.0
  %v1617 = vadd.f32 %v1615, 1.0
  %v1618 = vrcp.pop %v1616
  %v1619 = vmul.f32 1.0, %v1618
  %v1620 = vrcp.pop %v1617
  %v1621 = vmul.f32 1.0, %v1620
  %v1622 = vmul.f32 %v1619, %v32
  %v1623 = vmul.f32 %v1621, %v33
  %1624 = vst [vmem:[%s9] sm:$0xff] %v1622
  %1625 = vst [vmem:[%s9 + $0x8] sm:$0xff] %v1623
  // Predicated region
  $region38: #{lfca_forward.1} parent=0 // pred_check
    _
  $region39: #{lfca_forward.1} parent=0 // pred_check_branch
    %1627 = sbr.rel (0) target = $region41
  $region40: #{lfca_forward.1} parent=0 // pred_region
    _
  $region41: #{lfca_forward.1} parent=0 // pred_fallthru
    _
  // Predicated region
  $region42: #{lfca_forward.1} parent=0 // pred_check
    _
  $region43: #{lfca_forward.1} parent=0 // pred_check_branch
    %1629 = sbr.rel (0) target = $region45
  $region44: #{lfca_forward.1} parent=0 // pred_region
    _
  $region45: #{lfca_forward.1} parent=0 // pred_fallthru
    _

</llo_original>
